<compile_context>
chip_gen: v7x
topology: tpu7x:2x2x1
jax: 0.10.0
libtpu: 0.0.40
codegen_flags: <defaults>
</compile_context>

<pallas_src>
import functools

import jax
import jax.numpy as jnp
from jax.experimental import pallas as pl
from jax.experimental.pallas import tpu as pltpu

LN_EPS = 1e-5
PAD = 128          # lane width everything is padded to
HEAD_HIDDEN = 64   # pi_h / v_h width (fused -> 128)


# --------------------------------------------------------------------------
# Kernel
# --------------------------------------------------------------------------
def _poker_kernel(n_blocks, hidden_dim, action_size, param_dtype,
                  x_ref, w_in_ref, w_ref, vec_ref, out_ref):
    inv_h = 1.0 / float(hidden_dim)

    def vec(i):                       # [1, PAD] f32 row of the vector slab
        return vec_ref[pl.ds(i, 1), :]

    def matmul(a, wi):
        # Cast ONLY the matmul operands to the (bf16) weight dtype; accumulate
        # in f32 on the MXU.  Elementwise math stays f32 (important on v5e).
        return jnp.dot(a.astype(param_dtype), w_ref[wi],
                       preferred_element_type=jnp.float32)

    def silu(z):
        return z * jax.nn.sigmoid(z)

    def layernorm(y, gi):
        # Two independent reductions (overlap in XLU): var = E[y^2] - mean^2.
        # Padded lanes of y / gamma / beta are zero, so sums over 128 lanes
        # equal sums over the true `hidden_dim` lanes and padded lanes stay 0.
        gamma, beta = vec(gi), vec(gi + 1)
        s = jnp.sum(y, axis=-1, keepdims=True)
        sq = jnp.sum(y * y, axis=-1, keepdims=True)
        mean = s * inv_h
        var = sq * inv_h - mean * mean
        inv = jax.lax.rsqrt(var + LN_EPS)
        scale = gamma * inv
        return y * scale + (beta - mean * scale)

    x = x_ref[...]                    # [B, input_size] f32 (no host-side pad)

    # ---- stem: SiLU(LN(fc_in(x))) ----
    stem = jnp.dot(x.astype(param_dtype), w_in_ref[...],
                   preferred_element_type=jnp.float32)
    h = silu(layernorm(stem + vec(0), 1))

    # ---- residual blocks ----
    wi, vi = 0, 3
    for _ in range(n_blocks):
        out = silu(layernorm(matmul(h, wi) + vec(vi), vi + 1))
        out = layernorm(matmul(out, wi + 1), vi + 3)     # fc2 has no bias
        h = silu(out + h)
        wi += 2
        vi += 5

    # ---- fused policy + value heads ----
    z = silu(matmul(h, wi) + vec(vi))        # [B, 128] = [pi_h | v_h]
    y = matmul(z, wi + 1) + vec(vi + 1)      # cols [0:A) = pi logits, col A = v

    col = jax.lax.broadcasted_iota(jnp.int32, y.shape, 1)
    pi_mask = col < action_size
    ym = jnp.where(pi_mask, y, -jnp.inf)     # mask padded lanes out of softmax
    m = jnp.max(ym, axis=-1, keepdims=True)
    lse = m + jnp.log(jnp.sum(jnp.exp(ym - m), axis=-1, keepdims=True))
    logp = y - lse                           # log_softmax over the pi lanes

    # Single lane-dense store: [log_softmax(pi) | v | zeros]
    out_ref[...] = jnp.where(pi_mask, logp,
                             jnp.where(col == action_size, y, 0.0))


# --------------------------------------------------------------------------
# Host-side parameter construction / packing
# --------------------------------------------------------------------------
def init_params(key, input_size, hidden_dim, action_size, n_blocks=3,
                zero_fc2=True):
    """Synthetic parameters matching PokerNNet.__init__ shapes.
    Weights stored as [in, out]; biases / LN params as [1, dim]."""
    def dense(k, fan_in, fan_out):
        kw, kb = jax.random.split(k)
        lim = 1.0 / jnp.sqrt(fan_in)
        w = jax.random.uniform(kw, (fan_in, fan_out), jnp.float32, -lim, lim)
        b = jax.random.uniform(kb, (1, fan_out), jnp.float32, -lim, lim)
        return w, b

    keys = jax.random.split(key, 5 + 2 * n_blocks)
    ki = iter(range(len(keys)))
    params = []

    # fc_in + ln_in
    w, b = dense(keys[next(ki)], input_size, hidden_dim)
    params += [w, b,
               jnp.ones((1, hidden_dim), jnp.float32),
               jnp.zeros((1, hidden_dim), jnp.float32)]

    # ResBlocks
    for _ in range(n_blocks):
        w1, b1 = dense(keys[next(ki)], hidden_dim, hidden_dim)
        if zero_fc2:
            # Matches PyTorch init: fc2 weight zero-initialized, bias=False.
            w2 = jnp.zeros((hidden_dim, hidden_dim), jnp.float32)
            next(ki)
        else:
            w2, _ = dense(keys[next(ki)], hidden_dim, hidden_dim)
        params += [w1, b1,
                   jnp.ones((1, hidden_dim), jnp.float32),
                   jnp.zeros((1, hidden_dim), jnp.float32),
                   w2,
                   jnp.ones((1, hidden_dim), jnp.float32),
                   jnp.zeros((1, hidden_dim), jnp.float32)]

    # pi_h, pi_out, v_h, v_out
    w, b = dense(keys[next(ki)], hidden_dim, HEAD_HIDDEN); params += [w, b]
    w, b = dense(keys[next(ki)], HEAD_HIDDEN, action_size); params += [w, b]
    w, b = dense(keys[next(ki)], hidden_dim, HEAD_HIDDEN); params += [w, b]
    w, b = dense(keys[next(ki)], HEAD_HIDDEN, 1); params += [w, b]
    return params


def pack_params(params, input_size, action_size, n_blocks=3,
                param_dtype=jnp.bfloat16):
    """Pack the per-layer parameter list into three slabs:
       w_in     [input_size, PAD]      stem weight (param_dtype)
       w_slab   [2*n_blocks+2, PAD, PAD] remaining Linear weights, heads fused
                                          (param_dtype)
       vec_slab [3+5*n_blocks+2, PAD]  biases / LN gammas / LN betas (f32)"""
    p = list(params)

    def pop(n):
        vals = tuple(p[:n]); del p[:n]; return vals

    def pad_w(w):
        assert w.shape[0] <= PAD and w.shape[1] <= PAD
        return jnp.zeros((PAD, PAD), jnp.float32).at[:w.shape[0], :w.shape[1]].set(w)

    def pad_v(v):
        v = jnp.asarray(v).reshape(-1)
        assert v.shape[0] <= PAD
        return jnp.zeros((PAD,), jnp.float32).at[:v.shape[0]].set(v)

    weights, vecs = [], []

    # Stem (kept separate so the kernel needs no host-side x padding nor
    # an in-kernel weight slice).
    w_in, b_in, g_in, be_in = pop(4)
    hd = w_in.shape[1]
    assert w_in.shape[0] == input_size and hd <= PAD
    w_in_pad = jnp.zeros((input_size, PAD), jnp.float32).at[:, :hd].set(w_in)
    vecs += [pad_v(b_in), pad_v(g_in), pad_v(be_in)]

    for _ in range(n_blocks):
        w1, b1, g1, be1, w2, g2, be2 = pop(7)
        weights += [pad_w(w1), pad_w(w2)]
        vecs += [pad_v(b1), pad_v(g1), pad_v(be1), pad_v(g2), pad_v(be2)]

    w_pih, b_pih, w_pio, b_pio = pop(4)
    w_vh, b_vh, w_vo, b_vo = pop(4)
    assert not p, "unexpected leftover parameters"
    # Load-bearing invariants for the fused-head / padded-lane bookkeeping.
    assert 2 * HEAD_HIDDEN <= PAD and action_size + 1 <= PAD

    # Fused head hidden: z = SiLU(h @ [pi_h | v_h] + [b_pi_h | b_v_h])
    head_h = jnp.zeros((PAD, PAD), jnp.float32)
    head_h = head_h.at[:hd, :HEAD_HIDDEN].set(w_pih)
    head_h = head_h.at[:hd, HEAD_HIDDEN:2 * HEAD_HIDDEN].set(w_vh)
    head_hb = jnp.zeros((PAD,), jnp.float32)
    head_hb = head_hb.at[:HEAD_HIDDEN].set(b_pih.reshape(-1))
    head_hb = head_hb.at[HEAD_HIDDEN:2 * HEAD_HIDDEN].set(b_vh.reshape(-1))

    # Fused head output (block-diagonal): y[:, :A] = pi logits, y[:, A] = v
    head_o = jnp.zeros((PAD, PAD), jnp.float32)
    head_o = head_o.at[:HEAD_HIDDEN, :action_size].set(w_pio)
    head_o = head_o.at[HEAD_HIDDEN:2 * HEAD_HIDDEN,
                       action_size:action_size + 1].set(w_vo)
    head_ob = jnp.zeros((PAD,), jnp.float32)
    head_ob = head_ob.at[:action_size].set(b_pio.reshape(-1))
    head_ob = head_ob.at[action_size].set(b_vo.reshape(-1)[0])

    weights += [head_h, head_o]
    vecs += [head_hb, head_ob]

    return (w_in_pad.astype(param_dtype),
            jnp.stack(weights, axis=0).astype(param_dtype),
            jnp.stack(vecs, axis=0))          # vectors stay f32 (VPU math)


# --------------------------------------------------------------------------
# Wrapper
# --------------------------------------------------------------------------
@functools.partial(jax.jit, static_argnames=("hidden_dim", "action_size",
                                             "n_blocks", "block_batch"))
def poker_nnet_forward(x, w_in, w_slab, vec_slab, *, hidden_dim, action_size,
                       n_blocks=3, block_batch=None):
    """Returns the lane-dense [B, 128] output slab:
       cols [0:action_size) = log_softmax(pi), col action_size = v, rest 0.
    Split lazily at the consumer with split_pi_v()."""
    batch, _ = x.shape
    x = x.astype(jnp.float32)
    kernel = functools.partial(_poker_kernel, n_blocks, hidden_dim,
                               action_size, w_slab.dtype)
    out_shape = jax.ShapeDtypeStruct((batch, PAD), jnp.float32)
    vspec = pl.BlockSpec(memory_space=pltpu.MemorySpace.VMEM)

    if block_batch is None or batch <= block_batch:
        # Small-batch latency path: single gridless invocation, 4 input DMAs.
        return pl.pallas_call(
            kernel,
            out_shape=out_shape,
            in_specs=[vspec, vspec, vspec, vspec],
            out_specs=vspec,
        )(x, w_in, w_slab, vec_slab)

    # Large-batch throughput path: batch grid axis sharded across TensorCores;
    # constant index_maps keep the weight slabs VMEM-resident across steps.
    assert batch % block_batch == 0, "batch must be a multiple of block_batch"
    tb = block_batch
    return pl.pallas_call(
        kernel,
        out_shape=out_shape,
        grid=(batch // tb,),
        in_specs=[
            pl.BlockSpec((tb, x.shape[1]), lambda i: (i, 0)),
            pl.BlockSpec(w_in.shape, lambda i: (0, 0)),
            pl.BlockSpec(w_slab.shape, lambda i: (0, 0, 0)),
            pl.BlockSpec(vec_slab.shape, lambda i: (0, 0)),
        ],
        out_specs=pl.BlockSpec((tb, PAD), lambda i: (i, 0)),
        compiler_params=pltpu.CompilerParams(
            dimension_semantics=("parallel",)),
    )(x, w_in, w_slab, vec_slab)


def split_pi_v(slab, action_size):
    """Consumer-side split of the fused output slab into (log_softmax(pi), v)."""
    return slab[:, :action_size], slab[:, action_size:action_size + 1]


# --------------------------------------------------------------------------
# Pure-JAX reference (matches the PyTorch forward)
# --------------------------------------------------------------------------
def _silu(x):
    return x * jax.nn.sigmoid(x)


def _layernorm_ref(x, gamma, beta):
    mean = jnp.mean(x, axis=-1, keepdims=True)
    var = jnp.mean(jnp.square(x - mean), axis=-1, keepdims=True)
    return (x - mean) * jax.lax.rsqrt(var + LN_EPS) * gamma + beta


def _reference_forward(x, params, n_blocks=3):
    p = list(params)

    def pop(n):
        vals = tuple(p[:n]); del p[:n]; return vals

    w_in, b_in, g_in, be_in = pop(4)
    h = _silu(_layernorm_ref(x @ w_in + b_in, g_in, be_in))
    for _ in range(n_blocks):
        w1, b1, g1, be1, w2, g2, be2 = pop(7)
        out = _silu(_layernorm_ref(h @ w1 + b1, g1, be1))
        out = _layernorm_ref(out @ w2, g2, be2)
        h = _silu(out + h)
    w_pih, b_pih, w_pio, b_pio = pop(4)
    pi = jax.nn.log_softmax(_silu(h @ w_pih + b_pih) @ w_pio + b_pio, axis=-1)
    w_vh, b_vh, w_vo, b_vo = pop(4)
    v = _silu(h @ w_vh + b_vh) @ w_vo + b_vo
    return pi, v


# --------------------------------------------------------------------------
# Self-test
# --------------------------------------------------------------------------
if __name__ == "__main__":
    INPUT_SIZE = 56     # poker state encoding
    ACTION_SIZE = 10
    HIDDEN_DIM = 80     # module default when args has no .dim
    key = jax.random.PRNGKey(0)
    kx, kp, kp2 = jax.random.split(key, 3)

    def run_check(params, batch, param_dtype, tol, block_batch=None):
        x = jax.random.normal(kx, (batch, INPUT_SIZE), jnp.float32)
        w_in, w_slab, vec_slab = pack_params(params, INPUT_SIZE, ACTION_SIZE,
                                             param_dtype=param_dtype)
        slab = poker_nnet_forward(x, w_in, w_slab, vec_slab,
                                  hidden_dim=HIDDEN_DIM,
                                  action_size=ACTION_SIZE,
                                  block_batch=block_batch)
        jax.block_until_ready(slab)
        pi, v = split_pi_v(slab, ACTION_SIZE)
        pi_ref, v_ref = _reference_forward(x, params)
        assert pi.shape == (batch, ACTION_SIZE) and v.shape == (batch, 1)
        assert bool(jnp.all(jnp.isfinite(pi))) and bool(jnp.all(jnp.isfinite(v)))
        assert jnp.allclose(pi, pi_ref, atol=tol, rtol=tol), \
            float(jnp.max(jnp.abs(pi - pi_ref)))
        assert jnp.allclose(v, v_ref, atol=tol, rtol=tol), \
            float(jnp.max(jnp.abs(v - v_ref)))

    params_a = init_params(kp, INPUT_SIZE, HIDDEN_DIM, ACTION_SIZE, zero_fc2=True)
    params_b = init_params(kp2, INPUT_SIZE, HIDDEN_DIM, ACTION_SIZE, zero_fc2=False)

    # (a) f32 debug path, strict tolerance (PyTorch-matching fc2=0 init and
    #     non-zero fc2 so the residual fc2 matmul path is exercised).
    run_check(params_a, 8, jnp.float32, 1e-4)
    run_check(params_b, 8, jnp.float32, 1e-4)
    # (b) bf16 matmul-operand path (default deployment config), loose tolerance.
    run_check(params_b, 8, jnp.bfloat16, 5e-2)
    # (c) Batched grid path (parallel batch axis; constant weight index_maps).
    run_check(params_b, 16, jnp.bfloat16, 5e-2, block_batch=8)

    print("KERNEL_OK")
</pallas_src>

<mosaic_0001>
module attributes {stable_mosaic.version = 11 : i64} {
  func.func @_poker_kernel(%arg0: memref<8x56xf32, #tpu.memory_space<vmem>>, %arg1: memref<56x128xf32, #tpu.memory_space<vmem>>, %arg2: memref<8x128x128xf32, #tpu.memory_space<vmem>>, %arg3: memref<20x128xf32, #tpu.memory_space<vmem>>, %arg4: memref<8x128xf32, #tpu.memory_space<vmem>>) attributes {dimension_semantics = [], scalar_prefetch = 0 : i64, scratch_operands = 0 : i64, tpu.core_type = #tpu.core_type<tc>} {
    %c0 = arith.constant 0 : index
    %c0_0 = arith.constant 0 : index
    %0 = vector.load %arg0[%c0, %c0_0] : memref<8x56xf32, #tpu.memory_space<vmem>>, vector<8x56xf32>
    %c0_1 = arith.constant 0 : index
    %c0_2 = arith.constant 0 : index
    %1 = vector.load %arg1[%c0_1, %c0_2] : memref<56x128xf32, #tpu.memory_space<vmem>>, vector<56x128xf32>
    %cst = arith.constant dense<0.000000e+00> : vector<8x128xf32>
    %2 = tpu.matmul %0, %1, %cst {dimension_numbers = #tpu.dot_dimension_numbers<[1], [0], [0], [1], [0, 0, 1, 1], [], []>} : vector<8x56xf32>, vector<56x128xf32>, vector<8x128xf32> -> vector<8x128xf32>
    %c0_3 = arith.constant 0 : index
    %c0_4 = arith.constant 0 : index
    %3 = vector.load %arg3[%c0_3, %c0_4] : memref<20x128xf32, #tpu.memory_space<vmem>>, vector<1x128xf32>
    %4 = vector.broadcast %3 : vector<1x128xf32> to vector<8x128xf32>
    %5 = arith.addf %2, %4 : vector<8x128xf32>
    %c1 = arith.constant 1 : index
    %c0_5 = arith.constant 0 : index
    %6 = vector.load %arg3[%c1, %c0_5] : memref<20x128xf32, #tpu.memory_space<vmem>>, vector<1x128xf32>
    %c2 = arith.constant 2 : index
    %c0_6 = arith.constant 0 : index
    %7 = vector.load %arg3[%c2, %c0_6] : memref<20x128xf32, #tpu.memory_space<vmem>>, vector<1x128xf32>
    %cst_7 = arith.constant dense<0.000000e+00> : vector<8xf32>
    %8 = vector.multi_reduction <add>, %5, %cst_7 [1] : vector<8x128xf32> to vector<8xf32>
    %9 = vector.shape_cast %8 : vector<8xf32> to vector<8x1xf32>
    %10 = arith.mulf %5, %5 : vector<8x128xf32>
    %cst_8 = arith.constant dense<0.000000e+00> : vector<8xf32>
    %11 = vector.multi_reduction <add>, %10, %cst_8 [1] : vector<8x128xf32> to vector<8xf32>
    %12 = vector.shape_cast %11 : vector<8xf32> to vector<8x1xf32>
    %cst_9 = arith.constant 1.250000e-02 : f32
    %13 = vector.broadcast %cst_9 : f32 to vector<8x1xf32>
    %14 = arith.mulf %9, %13 : vector<8x1xf32>
    %cst_10 = arith.constant 1.250000e-02 : f32
    %15 = vector.broadcast %cst_10 : f32 to vector<8x1xf32>
    %16 = arith.mulf %12, %15 : vector<8x1xf32>
    %17 = arith.mulf %14, %14 : vector<8x1xf32>
    %18 = arith.subf %16, %17 : vector<8x1xf32>
    %cst_11 = arith.constant 9.99999974E-6 : f32
    %19 = vector.broadcast %cst_11 : f32 to vector<8x1xf32>
    %20 = arith.addf %18, %19 : vector<8x1xf32>
    %21 = math.rsqrt %20 : vector<8x1xf32>
    %22 = vector.broadcast %6 : vector<1x128xf32> to vector<8x128xf32>
    %23 = vector.broadcast %21 : vector<8x1xf32> to vector<8x128xf32>
    %24 = arith.mulf %22, %23 : vector<8x128xf32>
    %25 = arith.mulf %5, %24 : vector<8x128xf32>
    %26 = vector.broadcast %14 : vector<8x1xf32> to vector<8x128xf32>
    %27 = arith.mulf %26, %24 : vector<8x128xf32>
    %28 = vector.broadcast %7 : vector<1x128xf32> to vector<8x128xf32>
    %29 = arith.subf %28, %27 : vector<8x128xf32>
    %30 = arith.addf %25, %29 : vector<8x128xf32>
    %31 = arith.negf %30 : vector<8x128xf32>
    %32 = math.exp %31 : vector<8x128xf32>
    %cst_12 = arith.constant 1.000000e+00 : f32
    %33 = vector.broadcast %cst_12 : f32 to vector<8x128xf32>
    %34 = arith.addf %33, %32 : vector<8x128xf32>
    %35 = arith.divf %33, %34 : vector<8x128xf32>
    %36 = arith.mulf %30, %35 : vector<8x128xf32>
    %c0_13 = arith.constant 0 : index
    %c0_14 = arith.constant 0 : index
    %c0_15 = arith.constant 0 : index
    %37 = vector.load %arg2[%c0_13, %c0_14, %c0_15] : memref<8x128x128xf32, #tpu.memory_space<vmem>>, vector<1x128x128xf32>
    %38 = vector.shape_cast %37 : vector<1x128x128xf32> to vector<128x128xf32>
    %cst_16 = arith.constant dense<0.000000e+00> : vector<8x128xf32>
    %39 = tpu.matmul %36, %38, %cst_16 {dimension_numbers = #tpu.dot_dimension_numbers<[1], [0], [0], [1], [0, 0, 1, 1], [], []>} : vector<8x128xf32>, vector<128x128xf32>, vector<8x128xf32> -> vector<8x128xf32>
    %c3 = arith.constant 3 : index
    %c0_17 = arith.constant 0 : index
    %40 = vector.load %arg3[%c3, %c0_17] : memref<20x128xf32, #tpu.memory_space<vmem>>, vector<1x128xf32>
    %41 = vector.broadcast %40 : vector<1x128xf32> to vector<8x128xf32>
    %42 = arith.addf %39, %41 : vector<8x128xf32>
    %c4 = arith.constant 4 : index
    %c0_18 = arith.constant 0 : index
    %43 = vector.load %arg3[%c4, %c0_18] : memref<20x128xf32, #tpu.memory_space<vmem>>, vector<1x128xf32>
    %c5 = arith.constant 5 : index
    %c0_19 = arith.constant 0 : index
    %44 = vector.load %arg3[%c5, %c0_19] : memref<20x128xf32, #tpu.memory_space<vmem>>, vector<1x128xf32>
    %cst_20 = arith.constant dense<0.000000e+00> : vector<8xf32>
    %45 = vector.multi_reduction <add>, %42, %cst_20 [1] : vector<8x128xf32> to vector<8xf32>
    %46 = vector.shape_cast %45 : vector<8xf32> to vector<8x1xf32>
    %47 = arith.mulf %42, %42 : vector<8x128xf32>
    %cst_21 = arith.constant dense<0.000000e+00> : vector<8xf32>
    %48 = vector.multi_reduction <add>, %47, %cst_21 [1] : vector<8x128xf32> to vector<8xf32>
    %49 = vector.shape_cast %48 : vector<8xf32> to vector<8x1xf32>
    %cst_22 = arith.constant 1.250000e-02 : f32
    %50 = vector.broadcast %cst_22 : f32 to vector<8x1xf32>
    %51 = arith.mulf %46, %50 : vector<8x1xf32>
    %cst_23 = arith.constant 1.250000e-02 : f32
    %52 = vector.broadcast %cst_23 : f32 to vector<8x1xf32>
    %53 = arith.mulf %49, %52 : vector<8x1xf32>
    %54 = arith.mulf %51, %51 : vector<8x1xf32>
    %55 = arith.subf %53, %54 : vector<8x1xf32>
    %cst_24 = arith.constant 9.99999974E-6 : f32
    %56 = vector.broadcast %cst_24 : f32 to vector<8x1xf32>
    %57 = arith.addf %55, %56 : vector<8x1xf32>
    %58 = math.rsqrt %57 : vector<8x1xf32>
    %59 = vector.broadcast %43 : vector<1x128xf32> to vector<8x128xf32>
    %60 = vector.broadcast %58 : vector<8x1xf32> to vector<8x128xf32>
    %61 = arith.mulf %59, %60 : vector<8x128xf32>
    %62 = arith.mulf %42, %61 : vector<8x128xf32>
    %63 = vector.broadcast %51 : vector<8x1xf32> to vector<8x128xf32>
    %64 = arith.mulf %63, %61 : vector<8x128xf32>
    %65 = vector.broadcast %44 : vector<1x128xf32> to vector<8x128xf32>
    %66 = arith.subf %65, %64 : vector<8x128xf32>
    %67 = arith.addf %62, %66 : vector<8x128xf32>
    %68 = arith.negf %67 : vector<8x128xf32>
    %69 = math.exp %68 : vector<8x128xf32>
    %cst_25 = arith.constant 1.000000e+00 : f32
    %70 = vector.broadcast %cst_25 : f32 to vector<8x128xf32>
    %71 = arith.addf %70, %69 : vector<8x128xf32>
    %72 = arith.divf %70, %71 : vector<8x128xf32>
    %73 = arith.mulf %67, %72 : vector<8x128xf32>
    %c1_26 = arith.constant 1 : index
    %c0_27 = arith.constant 0 : index
    %c0_28 = arith.constant 0 : index
    %74 = vector.load %arg2[%c1_26, %c0_27, %c0_28] : memref<8x128x128xf32, #tpu.memory_space<vmem>>, vector<1x128x128xf32>
    %75 = vector.shape_cast %74 : vector<1x128x128xf32> to vector<128x128xf32>
    %cst_29 = arith.constant dense<0.000000e+00> : vector<8x128xf32>
    %76 = tpu.matmul %73, %75, %cst_29 {dimension_numbers = #tpu.dot_dimension_numbers<[1], [0], [0], [1], [0, 0, 1, 1], [], []>} : vector<8x128xf32>, vector<128x128xf32>, vector<8x128xf32> -> vector<8x128xf32>
    %c6 = arith.constant 6 : index
    %c0_30 = arith.constant 0 : index
    %77 = vector.load %arg3[%c6, %c0_30] : memref<20x128xf32, #tpu.memory_space<vmem>>, vector<1x128xf32>
    %c7 = arith.constant 7 : index
    %c0_31 = arith.constant 0 : index
    %78 = vector.load %arg3[%c7, %c0_31] : memref<20x128xf32, #tpu.memory_space<vmem>>, vector<1x128xf32>
    %cst_32 = arith.constant dense<0.000000e+00> : vector<8xf32>
    %79 = vector.multi_reduction <add>, %76, %cst_32 [1] : vector<8x128xf32> to vector<8xf32>
    %80 = vector.shape_cast %79 : vector<8xf32> to vector<8x1xf32>
    %81 = arith.mulf %76, %76 : vector<8x128xf32>
    %cst_33 = arith.constant dense<0.000000e+00> : vector<8xf32>
    %82 = vector.multi_reduction <add>, %81, %cst_33 [1] : vector<8x128xf32> to vector<8xf32>
    %83 = vector.shape_cast %82 : vector<8xf32> to vector<8x1xf32>
    %cst_34 = arith.constant 1.250000e-02 : f32
    %84 = vector.broadcast %cst_34 : f32 to vector<8x1xf32>
    %85 = arith.mulf %80, %84 : vector<8x1xf32>
    %cst_35 = arith.constant 1.250000e-02 : f32
    %86 = vector.broadcast %cst_35 : f32 to vector<8x1xf32>
    %87 = arith.mulf %83, %86 : vector<8x1xf32>
    %88 = arith.mulf %85, %85 : vector<8x1xf32>
    %89 = arith.subf %87, %88 : vector<8x1xf32>
    %cst_36 = arith.constant 9.99999974E-6 : f32
    %90 = vector.broadcast %cst_36 : f32 to vector<8x1xf32>
    %91 = arith.addf %89, %90 : vector<8x1xf32>
    %92 = math.rsqrt %91 : vector<8x1xf32>
    %93 = vector.broadcast %77 : vector<1x128xf32> to vector<8x128xf32>
    %94 = vector.broadcast %92 : vector<8x1xf32> to vector<8x128xf32>
    %95 = arith.mulf %93, %94 : vector<8x128xf32>
    %96 = arith.mulf %76, %95 : vector<8x128xf32>
    %97 = vector.broadcast %85 : vector<8x1xf32> to vector<8x128xf32>
    %98 = arith.mulf %97, %95 : vector<8x128xf32>
    %99 = vector.broadcast %78 : vector<1x128xf32> to vector<8x128xf32>
    %100 = arith.subf %99, %98 : vector<8x128xf32>
    %101 = arith.addf %96, %100 : vector<8x128xf32>
    %102 = arith.addf %101, %36 : vector<8x128xf32>
    %103 = arith.negf %102 : vector<8x128xf32>
    %104 = math.exp %103 : vector<8x128xf32>
    %cst_37 = arith.constant 1.000000e+00 : f32
    %105 = vector.broadcast %cst_37 : f32 to vector<8x128xf32>
    %106 = arith.addf %105, %104 : vector<8x128xf32>
    %107 = arith.divf %105, %106 : vector<8x128xf32>
    %108 = arith.mulf %102, %107 : vector<8x128xf32>
    %c2_38 = arith.constant 2 : index
    %c0_39 = arith.constant 0 : index
    %c0_40 = arith.constant 0 : index
    %109 = vector.load %arg2[%c2_38, %c0_39, %c0_40] : memref<8x128x128xf32, #tpu.memory_space<vmem>>, vector<1x128x128xf32>
    %110 = vector.shape_cast %109 : vector<1x128x128xf32> to vector<128x128xf32>
    %cst_41 = arith.constant dense<0.000000e+00> : vector<8x128xf32>
    %111 = tpu.matmul %108, %110, %cst_41 {dimension_numbers = #tpu.dot_dimension_numbers<[1], [0], [0], [1], [0, 0, 1, 1], [], []>} : vector<8x128xf32>, vector<128x128xf32>, vector<8x128xf32> -> vector<8x128xf32>
    %c8 = arith.constant 8 : index
    %c0_42 = arith.constant 0 : index
    %112 = vector.load %arg3[%c8, %c0_42] : memref<20x128xf32, #tpu.memory_space<vmem>>, vector<1x128xf32>
    %113 = vector.broadcast %112 : vector<1x128xf32> to vector<8x128xf32>
    %114 = arith.addf %111, %113 : vector<8x128xf32>
    %c9 = arith.constant 9 : index
    %c0_43 = arith.constant 0 : index
    %115 = vector.load %arg3[%c9, %c0_43] : memref<20x128xf32, #tpu.memory_space<vmem>>, vector<1x128xf32>
    %c10 = arith.constant 10 : index
    %c0_44 = arith.constant 0 : index
    %116 = vector.load %arg3[%c10, %c0_44] : memref<20x128xf32, #tpu.memory_space<vmem>>, vector<1x128xf32>
    %cst_45 = arith.constant dense<0.000000e+00> : vector<8xf32>
    %117 = vector.multi_reduction <add>, %114, %cst_45 [1] : vector<8x128xf32> to vector<8xf32>
    %118 = vector.shape_cast %117 : vector<8xf32> to vector<8x1xf32>
    %119 = arith.mulf %114, %114 : vector<8x128xf32>
    %cst_46 = arith.constant dense<0.000000e+00> : vector<8xf32>
    %120 = vector.multi_reduction <add>, %119, %cst_46 [1] : vector<8x128xf32> to vector<8xf32>
    %121 = vector.shape_cast %120 : vector<8xf32> to vector<8x1xf32>
    %cst_47 = arith.constant 1.250000e-02 : f32
    %122 = vector.broadcast %cst_47 : f32 to vector<8x1xf32>
    %123 = arith.mulf %118, %122 : vector<8x1xf32>
    %cst_48 = arith.constant 1.250000e-02 : f32
    %124 = vector.broadcast %cst_48 : f32 to vector<8x1xf32>
    %125 = arith.mulf %121, %124 : vector<8x1xf32>
    %126 = arith.mulf %123, %123 : vector<8x1xf32>
    %127 = arith.subf %125, %126 : vector<8x1xf32>
    %cst_49 = arith.constant 9.99999974E-6 : f32
    %128 = vector.broadcast %cst_49 : f32 to vector<8x1xf32>
    %129 = arith.addf %127, %128 : vector<8x1xf32>
    %130 = math.rsqrt %129 : vector<8x1xf32>
    %131 = vector.broadcast %115 : vector<1x128xf32> to vector<8x128xf32>
    %132 = vector.broadcast %130 : vector<8x1xf32> to vector<8x128xf32>
    %133 = arith.mulf %131, %132 : vector<8x128xf32>
    %134 = arith.mulf %114, %133 : vector<8x128xf32>
    %135 = vector.broadcast %123 : vector<8x1xf32> to vector<8x128xf32>
    %136 = arith.mulf %135, %133 : vector<8x128xf32>
    %137 = vector.broadcast %116 : vector<1x128xf32> to vector<8x128xf32>
    %138 = arith.subf %137, %136 : vector<8x128xf32>
    %139 = arith.addf %134, %138 : vector<8x128xf32>
    %140 = arith.negf %139 : vector<8x128xf32>
    %141 = math.exp %140 : vector<8x128xf32>
    %cst_50 = arith.constant 1.000000e+00 : f32
    %142 = vector.broadcast %cst_50 : f32 to vector<8x128xf32>
    %143 = arith.addf %142, %141 : vector<8x128xf32>
    %144 = arith.divf %142, %143 : vector<8x128xf32>
    %145 = arith.mulf %139, %144 : vector<8x128xf32>
    %c3_51 = arith.constant 3 : index
    %c0_52 = arith.constant 0 : index
    %c0_53 = arith.constant 0 : index
    %146 = vector.load %arg2[%c3_51, %c0_52, %c0_53] : memref<8x128x128xf32, #tpu.memory_space<vmem>>, vector<1x128x128xf32>
    %147 = vector.shape_cast %146 : vector<1x128x128xf32> to vector<128x128xf32>
    %cst_54 = arith.constant dense<0.000000e+00> : vector<8x128xf32>
    %148 = tpu.matmul %145, %147, %cst_54 {dimension_numbers = #tpu.dot_dimension_numbers<[1], [0], [0], [1], [0, 0, 1, 1], [], []>} : vector<8x128xf32>, vector<128x128xf32>, vector<8x128xf32> -> vector<8x128xf32>
    %c11 = arith.constant 11 : index
    %c0_55 = arith.constant 0 : index
    %149 = vector.load %arg3[%c11, %c0_55] : memref<20x128xf32, #tpu.memory_space<vmem>>, vector<1x128xf32>
    %c12 = arith.constant 12 : index
    %c0_56 = arith.constant 0 : index
    %150 = vector.load %arg3[%c12, %c0_56] : memref<20x128xf32, #tpu.memory_space<vmem>>, vector<1x128xf32>
    %cst_57 = arith.constant dense<0.000000e+00> : vector<8xf32>
    %151 = vector.multi_reduction <add>, %148, %cst_57 [1] : vector<8x128xf32> to vector<8xf32>
    %152 = vector.shape_cast %151 : vector<8xf32> to vector<8x1xf32>
    %153 = arith.mulf %148, %148 : vector<8x128xf32>
    %cst_58 = arith.constant dense<0.000000e+00> : vector<8xf32>
    %154 = vector.multi_reduction <add>, %153, %cst_58 [1] : vector<8x128xf32> to vector<8xf32>
    %155 = vector.shape_cast %154 : vector<8xf32> to vector<8x1xf32>
    %cst_59 = arith.constant 1.250000e-02 : f32
    %156 = vector.broadcast %cst_59 : f32 to vector<8x1xf32>
    %157 = arith.mulf %152, %156 : vector<8x1xf32>
    %cst_60 = arith.constant 1.250000e-02 : f32
    %158 = vector.broadcast %cst_60 : f32 to vector<8x1xf32>
    %159 = arith.mulf %155, %158 : vector<8x1xf32>
    %160 = arith.mulf %157, %157 : vector<8x1xf32>
    %161 = arith.subf %159, %160 : vector<8x1xf32>
    %cst_61 = arith.constant 9.99999974E-6 : f32
    %162 = vector.broadcast %cst_61 : f32 to vector<8x1xf32>
    %163 = arith.addf %161, %162 : vector<8x1xf32>
    %164 = math.rsqrt %163 : vector<8x1xf32>
    %165 = vector.broadcast %149 : vector<1x128xf32> to vector<8x128xf32>
    %166 = vector.broadcast %164 : vector<8x1xf32> to vector<8x128xf32>
    %167 = arith.mulf %165, %166 : vector<8x128xf32>
    %168 = arith.mulf %148, %167 : vector<8x128xf32>
    %169 = vector.broadcast %157 : vector<8x1xf32> to vector<8x128xf32>
    %170 = arith.mulf %169, %167 : vector<8x128xf32>
    %171 = vector.broadcast %150 : vector<1x128xf32> to vector<8x128xf32>
    %172 = arith.subf %171, %170 : vector<8x128xf32>
    %173 = arith.addf %168, %172 : vector<8x128xf32>
    %174 = arith.addf %173, %108 : vector<8x128xf32>
    %175 = arith.negf %174 : vector<8x128xf32>
    %176 = math.exp %175 : vector<8x128xf32>
    %cst_62 = arith.constant 1.000000e+00 : f32
    %177 = vector.broadcast %cst_62 : f32 to vector<8x128xf32>
    %178 = arith.addf %177, %176 : vector<8x128xf32>
    %179 = arith.divf %177, %178 : vector<8x128xf32>
    %180 = arith.mulf %174, %179 : vector<8x128xf32>
    %c4_63 = arith.constant 4 : index
    %c0_64 = arith.constant 0 : index
    %c0_65 = arith.constant 0 : index
    %181 = vector.load %arg2[%c4_63, %c0_64, %c0_65] : memref<8x128x128xf32, #tpu.memory_space<vmem>>, vector<1x128x128xf32>
    %182 = vector.shape_cast %181 : vector<1x128x128xf32> to vector<128x128xf32>
    %cst_66 = arith.constant dense<0.000000e+00> : vector<8x128xf32>
    %183 = tpu.matmul %180, %182, %cst_66 {dimension_numbers = #tpu.dot_dimension_numbers<[1], [0], [0], [1], [0, 0, 1, 1], [], []>} : vector<8x128xf32>, vector<128x128xf32>, vector<8x128xf32> -> vector<8x128xf32>
    %c13 = arith.constant 13 : index
    %c0_67 = arith.constant 0 : index
    %184 = vector.load %arg3[%c13, %c0_67] : memref<20x128xf32, #tpu.memory_space<vmem>>, vector<1x128xf32>
    %185 = vector.broadcast %184 : vector<1x128xf32> to vector<8x128xf32>
    %186 = arith.addf %183, %185 : vector<8x128xf32>
    %c14 = arith.constant 14 : index
    %c0_68 = arith.constant 0 : index
    %187 = vector.load %arg3[%c14, %c0_68] : memref<20x128xf32, #tpu.memory_space<vmem>>, vector<1x128xf32>
    %c15 = arith.constant 15 : index
    %c0_69 = arith.constant 0 : index
    %188 = vector.load %arg3[%c15, %c0_69] : memref<20x128xf32, #tpu.memory_space<vmem>>, vector<1x128xf32>
    %cst_70 = arith.constant dense<0.000000e+00> : vector<8xf32>
    %189 = vector.multi_reduction <add>, %186, %cst_70 [1] : vector<8x128xf32> to vector<8xf32>
    %190 = vector.shape_cast %189 : vector<8xf32> to vector<8x1xf32>
    %191 = arith.mulf %186, %186 : vector<8x128xf32>
    %cst_71 = arith.constant dense<0.000000e+00> : vector<8xf32>
    %192 = vector.multi_reduction <add>, %191, %cst_71 [1] : vector<8x128xf32> to vector<8xf32>
    %193 = vector.shape_cast %192 : vector<8xf32> to vector<8x1xf32>
    %cst_72 = arith.constant 1.250000e-02 : f32
    %194 = vector.broadcast %cst_72 : f32 to vector<8x1xf32>
    %195 = arith.mulf %190, %194 : vector<8x1xf32>
    %cst_73 = arith.constant 1.250000e-02 : f32
    %196 = vector.broadcast %cst_73 : f32 to vector<8x1xf32>
    %197 = arith.mulf %193, %196 : vector<8x1xf32>
    %198 = arith.mulf %195, %195 : vector<8x1xf32>
    %199 = arith.subf %197, %198 : vector<8x1xf32>
    %cst_74 = arith.constant 9.99999974E-6 : f32
    %200 = vector.broadcast %cst_74 : f32 to vector<8x1xf32>
    %201 = arith.addf %199, %200 : vector<8x1xf32>
    %202 = math.rsqrt %201 : vector<8x1xf32>
    %203 = vector.broadcast %187 : vector<1x128xf32> to vector<8x128xf32>
    %204 = vector.broadcast %202 : vector<8x1xf32> to vector<8x128xf32>
    %205 = arith.mulf %203, %204 : vector<8x128xf32>
    %206 = arith.mulf %186, %205 : vector<8x128xf32>
    %207 = vector.broadcast %195 : vector<8x1xf32> to vector<8x128xf32>
    %208 = arith.mulf %207, %205 : vector<8x128xf32>
    %209 = vector.broadcast %188 : vector<1x128xf32> to vector<8x128xf32>
    %210 = arith.subf %209, %208 : vector<8x128xf32>
    %211 = arith.addf %206, %210 : vector<8x128xf32>
    %212 = arith.negf %211 : vector<8x128xf32>
    %213 = math.exp %212 : vector<8x128xf32>
    %cst_75 = arith.constant 1.000000e+00 : f32
    %214 = vector.broadcast %cst_75 : f32 to vector<8x128xf32>
    %215 = arith.addf %214, %213 : vector<8x128xf32>
    %216 = arith.divf %214, %215 : vector<8x128xf32>
    %217 = arith.mulf %211, %216 : vector<8x128xf32>
    %c5_76 = arith.constant 5 : index
    %c0_77 = arith.constant 0 : index
    %c0_78 = arith.constant 0 : index
    %218 = vector.load %arg2[%c5_76, %c0_77, %c0_78] : memref<8x128x128xf32, #tpu.memory_space<vmem>>, vector<1x128x128xf32>
    %219 = vector.shape_cast %218 : vector<1x128x128xf32> to vector<128x128xf32>
    %cst_79 = arith.constant dense<0.000000e+00> : vector<8x128xf32>
    %220 = tpu.matmul %217, %219, %cst_79 {dimension_numbers = #tpu.dot_dimension_numbers<[1], [0], [0], [1], [0, 0, 1, 1], [], []>} : vector<8x128xf32>, vector<128x128xf32>, vector<8x128xf32> -> vector<8x128xf32>
    %c16 = arith.constant 16 : index
    %c0_80 = arith.constant 0 : index
    %221 = vector.load %arg3[%c16, %c0_80] : memref<20x128xf32, #tpu.memory_space<vmem>>, vector<1x128xf32>
    %c17 = arith.constant 17 : index
    %c0_81 = arith.constant 0 : index
    %222 = vector.load %arg3[%c17, %c0_81] : memref<20x128xf32, #tpu.memory_space<vmem>>, vector<1x128xf32>
    %cst_82 = arith.constant dense<0.000000e+00> : vector<8xf32>
    %223 = vector.multi_reduction <add>, %220, %cst_82 [1] : vector<8x128xf32> to vector<8xf32>
    %224 = vector.shape_cast %223 : vector<8xf32> to vector<8x1xf32>
    %225 = arith.mulf %220, %220 : vector<8x128xf32>
    %cst_83 = arith.constant dense<0.000000e+00> : vector<8xf32>
    %226 = vector.multi_reduction <add>, %225, %cst_83 [1] : vector<8x128xf32> to vector<8xf32>
    %227 = vector.shape_cast %226 : vector<8xf32> to vector<8x1xf32>
    %cst_84 = arith.constant 1.250000e-02 : f32
    %228 = vector.broadcast %cst_84 : f32 to vector<8x1xf32>
    %229 = arith.mulf %224, %228 : vector<8x1xf32>
    %cst_85 = arith.constant 1.250000e-02 : f32
    %230 = vector.broadcast %cst_85 : f32 to vector<8x1xf32>
    %231 = arith.mulf %227, %230 : vector<8x1xf32>
    %232 = arith.mulf %229, %229 : vector<8x1xf32>
    %233 = arith.subf %231, %232 : vector<8x1xf32>
    %cst_86 = arith.constant 9.99999974E-6 : f32
    %234 = vector.broadcast %cst_86 : f32 to vector<8x1xf32>
    %235 = arith.addf %233, %234 : vector<8x1xf32>
    %236 = math.rsqrt %235 : vector<8x1xf32>
    %237 = vector.broadcast %221 : vector<1x128xf32> to vector<8x128xf32>
    %238 = vector.broadcast %236 : vector<8x1xf32> to vector<8x128xf32>
    %239 = arith.mulf %237, %238 : vector<8x128xf32>
    %240 = arith.mulf %220, %239 : vector<8x128xf32>
    %241 = vector.broadcast %229 : vector<8x1xf32> to vector<8x128xf32>
    %242 = arith.mulf %241, %239 : vector<8x128xf32>
    %243 = vector.broadcast %222 : vector<1x128xf32> to vector<8x128xf32>
    %244 = arith.subf %243, %242 : vector<8x128xf32>
    %245 = arith.addf %240, %244 : vector<8x128xf32>
    %246 = arith.addf %245, %180 : vector<8x128xf32>
    %247 = arith.negf %246 : vector<8x128xf32>
    %248 = math.exp %247 : vector<8x128xf32>
    %cst_87 = arith.constant 1.000000e+00 : f32
    %249 = vector.broadcast %cst_87 : f32 to vector<8x128xf32>
    %250 = arith.addf %249, %248 : vector<8x128xf32>
    %251 = arith.divf %249, %250 : vector<8x128xf32>
    %252 = arith.mulf %246, %251 : vector<8x128xf32>
    %c6_88 = arith.constant 6 : index
    %c0_89 = arith.constant 0 : index
    %c0_90 = arith.constant 0 : index
    %253 = vector.load %arg2[%c6_88, %c0_89, %c0_90] : memref<8x128x128xf32, #tpu.memory_space<vmem>>, vector<1x128x128xf32>
    %254 = vector.shape_cast %253 : vector<1x128x128xf32> to vector<128x128xf32>
    %cst_91 = arith.constant dense<0.000000e+00> : vector<8x128xf32>
    %255 = tpu.matmul %252, %254, %cst_91 {dimension_numbers = #tpu.dot_dimension_numbers<[1], [0], [0], [1], [0, 0, 1, 1], [], []>} : vector<8x128xf32>, vector<128x128xf32>, vector<8x128xf32> -> vector<8x128xf32>
    %c18 = arith.constant 18 : index
    %c0_92 = arith.constant 0 : index
    %256 = vector.load %arg3[%c18, %c0_92] : memref<20x128xf32, #tpu.memory_space<vmem>>, vector<1x128xf32>
    %257 = vector.broadcast %256 : vector<1x128xf32> to vector<8x128xf32>
    %258 = arith.addf %255, %257 : vector<8x128xf32>
    %259 = arith.negf %258 : vector<8x128xf32>
    %260 = math.exp %259 : vector<8x128xf32>
    %cst_93 = arith.constant 1.000000e+00 : f32
    %261 = vector.broadcast %cst_93 : f32 to vector<8x128xf32>
    %262 = arith.addf %261, %260 : vector<8x128xf32>
    %263 = arith.divf %261, %262 : vector<8x128xf32>
    %264 = arith.mulf %258, %263 : vector<8x128xf32>
    %c7_94 = arith.constant 7 : index
    %c0_95 = arith.constant 0 : index
    %c0_96 = arith.constant 0 : index
    %265 = vector.load %arg2[%c7_94, %c0_95, %c0_96] : memref<8x128x128xf32, #tpu.memory_space<vmem>>, vector<1x128x128xf32>
    %266 = vector.shape_cast %265 : vector<1x128x128xf32> to vector<128x128xf32>
    %cst_97 = arith.constant dense<0.000000e+00> : vector<8x128xf32>
    %267 = tpu.matmul %264, %266, %cst_97 {dimension_numbers = #tpu.dot_dimension_numbers<[1], [0], [0], [1], [0, 0, 1, 1], [], []>} : vector<8x128xf32>, vector<128x128xf32>, vector<8x128xf32> -> vector<8x128xf32>
    %c19 = arith.constant 19 : index
    %c0_98 = arith.constant 0 : index
    %268 = vector.load %arg3[%c19, %c0_98] : memref<20x128xf32, #tpu.memory_space<vmem>>, vector<1x128xf32>
    %269 = vector.broadcast %268 : vector<1x128xf32> to vector<8x128xf32>
    %270 = arith.addf %267, %269 : vector<8x128xf32>
    %271 = tpu.iota {dimensions = array<i32: 1>} : vector<8x128xi32>
    %c10_i32 = arith.constant 10 : i32
    %272 = vector.broadcast %c10_i32 : i32 to vector<8x128xi32>
    %273 = arith.cmpi slt, %271, %272 : vector<8x128xi32>
    %cst_99 = arith.constant 0xFF800000 : f32
    %274 = vector.broadcast %cst_99 : f32 to vector<8x128xf32>
    %275 = arith.select %273, %270, %274 : vector<8x128xi1>, vector<8x128xf32>
    %cst_100 = arith.constant dense<0xFF800000> : vector<8xf32>
    %276 = vector.multi_reduction <maximumf>, %275, %cst_100 [1] : vector<8x128xf32> to vector<8xf32>
    %277 = vector.shape_cast %276 : vector<8xf32> to vector<8x1xf32>
    %278 = vector.broadcast %277 : vector<8x1xf32> to vector<8x128xf32>
    %279 = arith.subf %275, %278 : vector<8x128xf32>
    %280 = math.exp %279 : vector<8x128xf32>
    %cst_101 = arith.constant dense<0.000000e+00> : vector<8xf32>
    %281 = vector.multi_reduction <add>, %280, %cst_101 [1] : vector<8x128xf32> to vector<8xf32>
    %282 = vector.shape_cast %281 : vector<8xf32> to vector<8x1xf32>
    %283 = math.log %282 : vector<8x1xf32>
    %284 = arith.addf %277, %283 : vector<8x1xf32>
    %285 = vector.broadcast %284 : vector<8x1xf32> to vector<8x128xf32>
    %286 = arith.subf %270, %285 : vector<8x128xf32>
    %c10_i32_102 = arith.constant 10 : i32
    %287 = vector.broadcast %c10_i32_102 : i32 to vector<8x128xi32>
    %288 = arith.cmpi eq, %271, %287 : vector<8x128xi32>
    %cst_103 = arith.constant 0.000000e+00 : f32
    %289 = vector.broadcast %cst_103 : f32 to vector<8x128xf32>
    %290 = arith.select %288, %270, %289 : vector<8x128xi1>, vector<8x128xf32>
    %291 = arith.select %273, %286, %290 : vector<8x128xi1>, vector<8x128xf32>
    %c0_104 = arith.constant 0 : index
    %c0_105 = arith.constant 0 : index
    %292 = vector.load %arg4[%c0_104, %c0_105] : memref<8x128xf32, #tpu.memory_space<vmem>>, vector<8x128xf32>
    tpu.vector_store %arg4[%c0_104, %c0_105], %291 {strides = array<i32>} : memref<8x128xf32, #tpu.memory_space<vmem>>, vector<8x128xf32>,
    return
  }
}

</mosaic_0001>

<llo_original>
// kernel: poker_nnet_forward.1
$region0: #{poker_nnet_forward.1}
  #allocation0 [shape = 'u32[]', space=smem, size = 0x4, offset = 0x4, fixed_abs, tag = 'smem constant byte address 0x4 - core index']
  #allocation1 [shape = 'u32[144,128]{1,0:T(1,128)}', space=vmem, size = 0x12000, scoped, tag = 'internal scratch']
  %s0 = inlined_call_operand.hbm [shape: f32[8,56], index: 0, kind: input, shape index: {}]
  %s1 = inlined_call_operand.hbm [shape: f32[56,128], index: 1, kind: input, shape index: {}]
  %s2 = inlined_call_operand.hbm [shape: f32[8,128,128], index: 2, kind: input, shape index: {}]
  %s3 = inlined_call_operand.hbm [shape: f32[20,128], index: 3, kind: input, shape index: {}]
  %s4 = inlined_call_operand.hbm [shape: f32[8,128], index: 4, kind: output, shape index: {}]
  %s5 = sld [smem:[#allocation0]]
  $region42: #{poker_nnet_forward.1} parent=0
    _
  %s7 = ssub.s32 1, %s5
  %s8 = scalar_select 0, %s7, %s5
  $region1: #{poker_nnet_forward.1} parent=0
    #allocation2 [shape = 'u8[4096]{0}', space=vmem, size = 0x1000, scoped, tag = 'input window, operand 0, single buffered']
    #allocation3 [shape = 's32[1]{0}', space=sflag, size = 0x4, scoped, tag = 'scoped memory for poker_nnet_forward.1']
    #allocation4 [shape = 's32[1]{0}', space=sflag, size = 0x4, scoped, tag = 'scoped memory for poker_nnet_forward.1']
    #allocation5 [shape = 'u8[28672]{0}', space=vmem, size = 0x7000, scoped, tag = 'input window, operand 1, single buffered']
    #allocation6 [shape = 's32[1]{0}', space=sflag, size = 0x4, scoped, tag = 'scoped memory for poker_nnet_forward.1']
    #allocation7 [shape = 'u8[524288]{0}', space=vmem, size = 0x80000, scoped, tag = 'input window, operand 2, single buffered']
    #allocation8 [shape = 'u8[12288]{0}', space=vmem, size = 0x3000, scoped, tag = 'input window, operand 3, single buffered']
    #allocation9 [shape = 's32[1]{0}', space=sflag, size = 0x4, scoped, tag = 'scoped memory for poker_nnet_forward.1']
    #allocation10 [shape = 'u8[4096]{0}', space=vmem, size = 0x1000, scoped, tag = 'output window, operand 0, single buffered']
    %9 = vsyncpa [#allocation3], 0
    %10 = vsyncpa [#allocation6], 0
    %11 = vsyncpa [#allocation9], 0
    %12 = vsyncpa [#allocation4], 0
    // Predicated region
    $region2: #{poker_nnet_forward.1} parent=1 // pred_check
      _
    $region3: #{poker_nnet_forward.1} parent=1 // pred_check_branch
      %14 = sbr.rel (0) target = $region5
    $region4: #{poker_nnet_forward.1} parent=1 // pred_region
      %s16 = ssub.s32 128, 128
      %17 = vsyncadd [#allocation3], %s16
      %s19 = sshll.u32 [#allocation2], 4
      %s20 = int_to_ptr.vmem [resolvable:$true] %s19
      %22 = dma.hbm_to_vmem [thread:$0]  %s0, 128, %s20, [#allocation3]
    $region5: #{poker_nnet_forward.1} parent=1 // pred_fallthru
      _
    // Predicated region
    $region6: #{poker_nnet_forward.1} parent=1 // pred_check
      _
    $region7: #{poker_nnet_forward.1} parent=1 // pred_check_branch
      %24 = sbr.rel (0) target = $region9
    $region8: #{poker_nnet_forward.1} parent=1 // pred_region
      %s26 = ssub.s32 896, 896
      %27 = vsyncadd [#allocation6], %s26
      %s28 = sshll.u32 [#allocation5], 4
      %s29 = int_to_ptr.vmem [resolvable:$true] %s28
      %34 = dma.hbm_to_vmem [thread:$0]  %s1, 896, %s29, [#allocation6], 128, 128, 8
    $region9: #{poker_nnet_forward.1} parent=1 // pred_fallthru
      _
    // Predicated region
    $region10: #{poker_nnet_forward.1} parent=1 // pred_check
      _
    $region11: #{poker_nnet_forward.1} parent=1 // pred_check_branch
      %36 = sbr.rel (0) target = $region13
    $region12: #{poker_nnet_forward.1} parent=1 // pred_region
      %s38 = ssub.s32 16384, 16384
      %39 = vsyncadd [#allocation6], %s38
      %s40 = sshll.u32 [#allocation7], 4
      %s41 = int_to_ptr.vmem [resolvable:$true] %s40
      %46 = dma.hbm_to_vmem [thread:$0]  %s2, 16384, %s41, [#allocation6], 128, 128, 8
    $region13: #{poker_nnet_forward.1} parent=1 // pred_fallthru
      _
    // Predicated region
    $region14: #{poker_nnet_forward.1} parent=1 // pred_check
      _
    $region15: #{poker_nnet_forward.1} parent=1 // pred_check_branch
      %48 = sbr.rel (0) target = $region17
    $region16: #{poker_nnet_forward.1} parent=1 // pred_region
      %s50 = ssub.s32 384, 384
      %51 = vsyncadd [#allocation9], %s50
      %s52 = sshll.u32 [#allocation8], 4
      %s53 = int_to_ptr.vmem [resolvable:$true] %s52
      %58 = dma.hbm_to_vmem [thread:$0]  %s3, 384, %s53, [#allocation9], 128, 128, 8
    $region17: #{poker_nnet_forward.1} parent=1 // pred_fallthru
      _
    // Predicated region
    $region18: #{poker_nnet_forward.1} parent=1 // pred_check
      _
    $region19: #{poker_nnet_forward.1} parent=1 // pred_check_branch
      %60 = sbr.rel (0) target = $region21
    $region20: #{poker_nnet_forward.1} parent=1 // pred_region
      %61 = dma.done [#allocation3], 128
    $region21: #{poker_nnet_forward.1} parent=1 // pred_fallthru
      _
    // Predicated region
    $region22: #{poker_nnet_forward.1} parent=1 // pred_check
      _
    $region23: #{poker_nnet_forward.1} parent=1 // pred_check_branch
      %63 = sbr.rel (0) target = $region25
    $region24: #{poker_nnet_forward.1} parent=1 // pred_region
      %64 = dma.done [#allocation6], 896
    $region25: #{poker_nnet_forward.1} parent=1 // pred_fallthru
      _
    // Predicated region
    $region26: #{poker_nnet_forward.1} parent=1 // pred_check
      _
    $region27: #{poker_nnet_forward.1} parent=1 // pred_check_branch
      %66 = sbr.rel (0) target = $region29
    $region28: #{poker_nnet_forward.1} parent=1 // pred_region
      %67 = dma.done [#allocation6], 16384
    $region29: #{poker_nnet_forward.1} parent=1 // pred_fallthru
      _
    // Predicated region
    $region30: #{poker_nnet_forward.1} parent=1 // pred_check
      _
    $region31: #{poker_nnet_forward.1} parent=1 // pred_check_branch
      %69 = sbr.rel (0) target = $region33
    $region32: #{poker_nnet_forward.1} parent=1 // pred_region
      %70 = dma.done [#allocation9], 384
    $region33: #{poker_nnet_forward.1} parent=1 // pred_fallthru
      _
    %v71 = vld [vmem:[#allocation2] sm:$0xff]
    %v72 = vld [vmem:[#allocation5] sm:$0xff]
    %v73 = vld [vmem:[#allocation5 + $0x8] sm:$0xff]
    %v74 = vld [vmem:[#allocation5 + $0x10] sm:$0xff]
    %v75 = vld [vmem:[#allocation5 + $0x18] sm:$0xff]
    %v76 = vld [vmem:[#allocation5 + $0x20] sm:$0xff]
    %v77 = vld [vmem:[#allocation5 + $0x28] sm:$0xff]
    %v78 = vld [vmem:[#allocation5 + $0x30] sm:$0xff]
    %v79 = vld [vmem:[#allocation8] sm:$0x1]
    %v80 = vlaneseq
    %v81 = vshrl.u32 %v80, 7
    %v82 = vsub.s32 0, %v81
    %v83 = vrot.slane %v79, %v82
    %vm84 = vcmask 457728
    %v86 = vsel %vm84, %v71, 0
    %88 = vmatprep.subr.mxu0 0.0
    %89 = vmatpush1.msra.mxu0 %v72
    %90 = vmatprep.subr.mxu0 0.0
    %91 = vmatpush1.msra.mxu0 %v73
    %92 = vmatprep.subr.mxu0 0.0
    %93 = vmatpush1.msra.mxu0 %v74
    %94 = vmatprep.subr.mxu0 0.0
    %95 = vmatpush1.msra.mxu0 %v75
    %96 = vmatprep.subr.mxu0 0.0
    %97 = vmatpush1.msra.mxu0 %v76
    %98 = vmatprep.subr.mxu0 0.0
    %99 = vmatpush1.msra.mxu0 %v77
    %100 = vmatprep.subr.mxu0 0.0
    %101 = vmatpush1.msra.mxu0 %v78
    %102 = vmatprep.subr.mxu0 0.0
    %103 = vmatpush1.msra.mxu0 0.0
    %104 = vmatprep.subr.mxu0 0.0
    %105 = vmatpush1.msra.mxu0 0.0
    %106 = vmatprep.subr.mxu0 0.0
    %107 = vmatpush1.msra.mxu0 0.0
    %108 = vmatprep.subr.mxu0 0.0
    %109 = vmatpush1.msra.mxu0 0.0
    %110 = vmatprep.subr.mxu0 0.0
    %111 = vmatpush1.msra.mxu0 0.0
    %112 = vmatprep.subr.mxu0 0.0
    %113 = vmatpush1.msra.mxu0 0.0
    %114 = vmatprep.subr.mxu0 0.0
    %115 = vmatpush1.msra.mxu0 0.0
    %116 = vmatprep.subr.mxu0 0.0
    %117 = vmatpush1.msra.mxu0 0.0
    %118 = vmatprep.subr.mxu0 0.0
    %119 = vmatpush1.msra.mxu0 0.0
    %120 = vmatprep.subr.mxu0 0.0
    %121 = vmatpush1.msra.mxu0 0.0
    %122 = vmatprep.subr.mxu0 0.0
    %123 = vmatpush1.msra.mxu0 0.0
    %124 = vmatprep.subr.mxu0 0.0
    %125 = vmatpush1.msra.mxu0 0.0
    %126 = vmatprep.subr.mxu0 0.0
    %127 = vmatpush1.msra.mxu0 0.0
    %128 = vmatprep.subr.mxu0 0.0
    %129 = vmatpush1.msra.mxu0 0.0
    %130 = vmatprep.subr.mxu0 0.0
    %131 = vmatpush1.msra.mxu0 0.0
    %132 = vmatprep.subr.mxu0 0.0
    %133 = vmatpush1.msra.mxu0 0.0
    %134 = vmatprep.subr.mxu0 0.0
    %135 = vmatpush1.msra.mxu0 0.0
    %136 = vmatprep.subr.mxu0 0.0
    %137 = vmatpush1.msra.mxu0 0.0
    %138 = vmatprep.subr.mxu0 0.0
    %139 = vmatpush1.msra.mxu0 0.0
    %140 = vmatprep.subr.mxu0 0.0
    %141 = vmatpush1.msra.mxu0 0.0
    %142 = vmatprep.subr.mxu0 0.0
    %143 = vmatpush1.msra.mxu0 0.0
    %144 = vmatprep.subr.mxu0 0.0
    %145 = vmatpush1.msra.mxu0 0.0
    %146 = vmatprep.subr.mxu0 0.0
    %147 = vmatpush1.msra.mxu0 0.0
    %148 = vmatprep.subr.mxu0 0.0
    %149 = vmatpush1.msra.mxu0 0.0
    %150 = vmatprep.subr.mxu0 0.0
    %151 = vmatpush1.msra.mxu0 0.0
    %152 = vmatprep.mubr.f32.mxu0 0.0
    %153 = vmatmul.mubr.f32.gmra.mrb[0].mxu0 %v86
    %v154 = vpop.f32.mrb[0].mxu0
    %v155 = vadd.f32 %v83, %v154
    %v156 = vpop.f32.mrb[0].mxu0
    %157 = vdwg.mxu0
    %v158 = vld [vmem:[#allocation8 + $0x1] sm:$0x1]
    %v159 = vld [vmem:[#allocation8 + $0x2] sm:$0x1]
    %160 = vadd.xlane.f32.xlu0 %v155
    %v161 = vpop.xlane.xlu0 %160
    %v162 = vmul.f32 %v155, %v155
    %163 = vadd.xlane.f32.xlu0 %v162
    %v164 = vpop.xlane.xlu0 %163
    %v165 = vmul.f32 %v161, 0.0125
    %v166 = vmul.f32 %v164, 0.0125
    %v167 = vmul.f32 %v165, %v165
    %v168 = vsub.f32 %v166, %v167
    %v169 = vadd.f32 %v168, 1e-05
    %v170 = vrsqrt.pop %v169
    %v171 = vlaneseq
    %v172 = vshrl.u32 %v171, 7
    %v173 = vsub.s32 0, %v172
    %v174 = vrot.slane %v158, %v173
    %v175 = vmul.f32 %v174, %v170
    %v176 = vmul.f32 %v155, %v175
    %v177 = vmul.f32 %v165, %v175
    %v178 = vlaneseq
    %v179 = vshrl.u32 %v178, 7
    %v180 = vsub.s32 0, %v179
    %v181 = vrot.slane %v159, %v180
    %v182 = vsub.f32 %v181, %v177
    %v183 = vadd.f32 %v176, %v182
    %v184 = vxor.u32 %v183, 2147483648
    %v185 = vmul.f32 %v184, 1.442695
    %v186 = vpow.pop %v185
    %v187 = vadd.f32 %v186, 1.0
    %v188 = vrcp.pop %v187
    %v189 = vmul.f32 1.0, %v188
    %v190 = vmul.f32 %v183, %v189
    %v191 = vld [vmem:[#allocation7] sm:$0xff]
    %v192 = vld [vmem:[#allocation7 + $0x8] sm:$0xff]
    %v193 = vld [vmem:[#allocation7 + $0x10] sm:$0xff]
    %v194 = vld [vmem:[#allocation7 + $0x18] sm:$0xff]
    %v195 = vld [vmem:[#allocation7 + $0x20] sm:$0xff]
    %v196 = vld [vmem:[#allocation7 + $0x28] sm:$0xff]
    %v197 = vld [vmem:[#allocation7 + $0x30] sm:$0xff]
    %v198 = vld [vmem:[#allocation7 + $0x38] sm:$0xff]
    %v199 = vld [vmem:[#allocation7 + $0x40] sm:$0xff]
    %v200 = vld [vmem:[#allocation7 + $0x48] sm:$0xff]
    %v201 = vld [vmem:[#allocation7 + $0x50] sm:$0xff]
    %v202 = vld [vmem:[#allocation7 + $0x58] sm:$0xff]
    %v203 = vld [vmem:[#allocation7 + $0x60] sm:$0xff]
    %v204 = vld [vmem:[#allocation7 + $0x68] sm:$0xff]
    %v205 = vld [vmem:[#allocation7 + $0x70] sm:$0xff]
    %v206 = vld [vmem:[#allocation7 + $0x78] sm:$0xff]
    %v207 = vld [vmem:[#allocation8 + $0x3] sm:$0x1]
    %v208 = vlaneseq
    %v209 = vshrl.u32 %v208, 7
    %v210 = vsub.s32 0, %v209
    %v211 = vrot.slane %v207, %v210
    %212 = vmatprep.subr.mxu0 0.0
    %213 = vmatpush1.msra.mxu0 %v191
    %214 = vmatprep.subr.mxu0 0.0
    %215 = vmatpush1.msra.mxu0 %v192
    %216 = vmatprep.subr.mxu0 0.0
    %217 = vmatpush1.msra.mxu0 %v193
    %218 = vmatprep.subr.mxu0 0.0
    %219 = vmatpush1.msra.mxu0 %v194
    %220 = vmatprep.subr.mxu0 0.0
    %221 = vmatpush1.msra.mxu0 %v195
    %222 = vmatprep.subr.mxu0 0.0
    %223 = vmatpush1.msra.mxu0 %v196
    %224 = vmatprep.subr.mxu0 0.0
    %225 = vmatpush1.msra.mxu0 %v197
    %226 = vmatprep.subr.mxu0 0.0
    %227 = vmatpush1.msra.mxu0 %v198
    %228 = vmatprep.subr.mxu0 0.0
    %229 = vmatpush1.msra.mxu0 %v199
    %230 = vmatprep.subr.mxu0 0.0
    %231 = vmatpush1.msra.mxu0 %v200
    %232 = vmatprep.subr.mxu0 0.0
    %233 = vmatpush1.msra.mxu0 %v201
    %234 = vmatprep.subr.mxu0 0.0
    %235 = vmatpush1.msra.mxu0 %v202
    %236 = vmatprep.subr.mxu0 0.0
    %237 = vmatpush1.msra.mxu0 %v203
    %238 = vmatprep.subr.mxu0 0.0
    %239 = vmatpush1.msra.mxu0 %v204
    %240 = vmatprep.subr.mxu0 0.0
    %241 = vmatpush1.msra.mxu0 %v205
    %242 = vmatprep.subr.mxu0 0.0
    %243 = vmatpush1.msra.mxu0 %v206
    %244 = vmatprep.subr.mxu0 0.0
    %245 = vmatpush1.msra.mxu0 0.0
    %246 = vmatprep.subr.mxu0 0.0
    %247 = vmatpush1.msra.mxu0 0.0
    %248 = vmatprep.subr.mxu0 0.0
    %249 = vmatpush1.msra.mxu0 0.0
    %250 = vmatprep.subr.mxu0 0.0
    %251 = vmatpush1.msra.mxu0 0.0
    %252 = vmatprep.subr.mxu0 0.0
    %253 = vmatpush1.msra.mxu0 0.0
    %254 = vmatprep.subr.mxu0 0.0
    %255 = vmatpush1.msra.mxu0 0.0
    %256 = vmatprep.subr.mxu0 0.0
    %257 = vmatpush1.msra.mxu0 0.0
    %258 = vmatprep.subr.mxu0 0.0
    %259 = vmatpush1.msra.mxu0 0.0
    %260 = vmatprep.subr.mxu0 0.0
    %261 = vmatpush1.msra.mxu0 0.0
    %262 = vmatprep.subr.mxu0 0.0
    %263 = vmatpush1.msra.mxu0 0.0
    %264 = vmatprep.subr.mxu0 0.0
    %265 = vmatpush1.msra.mxu0 0.0
    %266 = vmatprep.subr.mxu0 0.0
    %267 = vmatpush1.msra.mxu0 0.0
    %268 = vmatprep.subr.mxu0 0.0
    %269 = vmatpush1.msra.mxu0 0.0
    %270 = vmatprep.subr.mxu0 0.0
    %271 = vmatpush1.msra.mxu0 0.0
    %272 = vmatprep.subr.mxu0 0.0
    %273 = vmatpush1.msra.mxu0 0.0
    %274 = vmatprep.subr.mxu0 0.0
    %275 = vmatpush1.msra.mxu0 0.0
    %276 = vmatprep.mubr.f32.mxu0 0.0
    %277 = vmatmul.mubr.f32.gmra.mrb[0].mxu0 %v190
    %v278 = vpop.f32.mrb[0].mxu0
    %v279 = vadd.f32 %v211, %v278
    %v280 = vpop.f32.mrb[0].mxu0
    %281 = vdwg.mxu0
    %v282 = vld [vmem:[#allocation8 + $0x4] sm:$0x1]
    %v283 = vld [vmem:[#allocation8 + $0x5] sm:$0x1]
    %284 = vadd.xlane.f32.xlu0 %v279
    %v285 = vpop.xlane.xlu0 %284
    %v286 = vmul.f32 %v279, %v279
    %287 = vadd.xlane.f32.xlu0 %v286
    %v288 = vpop.xlane.xlu0 %287
    %v289 = vmul.f32 %v285, 0.0125
    %v290 = vmul.f32 %v288, 0.0125
    %v291 = vmul.f32 %v289, %v289
    %v292 = vsub.f32 %v290, %v291
    %v293 = vadd.f32 %v292, 1e-05
    %v294 = vrsqrt.pop %v293
    %v295 = vlaneseq
    %v296 = vshrl.u32 %v295, 7
    %v297 = vsub.s32 0, %v296
    %v298 = vrot.slane %v282, %v297
    %v299 = vmul.f32 %v298, %v294
    %v300 = vmul.f32 %v279, %v299
    %v301 = vmul.f32 %v289, %v299
    %v302 = vlaneseq
    %v303 = vshrl.u32 %v302, 7
    %v304 = vsub.s32 0, %v303
    %v305 = vrot.slane %v283, %v304
    %v306 = vsub.f32 %v305, %v301
    %v307 = vadd.f32 %v300, %v306
    %v308 = vxor.u32 %v307, 2147483648
    %v309 = vmul.f32 %v308, 1.442695
    %v310 = vpow.pop %v309
    %v311 = vadd.f32 %v310, 1.0
    %v312 = vrcp.pop %v311
    %v313 = vmul.f32 1.0, %v312
    %v314 = vmul.f32 %v307, %v313
    %s315 = scalar_lea.vmem [#allocation7], 128
    %v316 = vld [vmem:[%s315] sm:$0xff]
    %v317 = vld [vmem:[%s315 + $0x8] sm:$0xff]
    %v318 = vld [vmem:[%s315 + $0x10] sm:$0xff]
    %v319 = vld [vmem:[%s315 + $0x18] sm:$0xff]
    %v320 = vld [vmem:[%s315 + $0x20] sm:$0xff]
    %v321 = vld [vmem:[%s315 + $0x28] sm:$0xff]
    %v322 = vld [vmem:[%s315 + $0x30] sm:$0xff]
    %v323 = vld [vmem:[%s315 + $0x38] sm:$0xff]
    %v324 = vld [vmem:[%s315 + $0x40] sm:$0xff]
    %v325 = vld [vmem:[%s315 + $0x48] sm:$0xff]
    %v326 = vld [vmem:[%s315 + $0x50] sm:$0xff]
    %v327 = vld [vmem:[%s315 + $0x58] sm:$0xff]
    %v328 = vld [vmem:[%s315 + $0x60] sm:$0xff]
    %v329 = vld [vmem:[%s315 + $0x68] sm:$0xff]
    %v330 = vld [vmem:[%s315 + $0x70] sm:$0xff]
    %v331 = vld [vmem:[%s315 + $0x78] sm:$0xff]
    %332 = vmatprep.subr.mxu0 0.0
    %333 = vmatpush1.msra.mxu0 %v316
    %334 = vmatprep.subr.mxu0 0.0
    %335 = vmatpush1.msra.mxu0 %v317
    %336 = vmatprep.subr.mxu0 0.0
    %337 = vmatpush1.msra.mxu0 %v318
    %338 = vmatprep.subr.mxu0 0.0
    %339 = vmatpush1.msra.mxu0 %v319
    %340 = vmatprep.subr.mxu0 0.0
    %341 = vmatpush1.msra.mxu0 %v320
    %342 = vmatprep.subr.mxu0 0.0
    %343 = vmatpush1.msra.mxu0 %v321
    %344 = vmatprep.subr.mxu0 0.0
    %345 = vmatpush1.msra.mxu0 %v322
    %346 = vmatprep.subr.mxu0 0.0
    %347 = vmatpush1.msra.mxu0 %v323
    %348 = vmatprep.subr.mxu0 0.0
    %349 = vmatpush1.msra.mxu0 %v324
    %350 = vmatprep.subr.mxu0 0.0
    %351 = vmatpush1.msra.mxu0 %v325
    %352 = vmatprep.subr.mxu0 0.0
    %353 = vmatpush1.msra.mxu0 %v326
    %354 = vmatprep.subr.mxu0 0.0
    %355 = vmatpush1.msra.mxu0 %v327
    %356 = vmatprep.subr.mxu0 0.0
    %357 = vmatpush1.msra.mxu0 %v328
    %358 = vmatprep.subr.mxu0 0.0
    %359 = vmatpush1.msra.mxu0 %v329
    %360 = vmatprep.subr.mxu0 0.0
    %361 = vmatpush1.msra.mxu0 %v330
    %362 = vmatprep.subr.mxu0 0.0
    %363 = vmatpush1.msra.mxu0 %v331
    %364 = vmatprep.subr.mxu0 0.0
    %365 = vmatpush1.msra.mxu0 0.0
    %366 = vmatprep.subr.mxu0 0.0
    %367 = vmatpush1.msra.mxu0 0.0
    %368 = vmatprep.subr.mxu0 0.0
    %369 = vmatpush1.msra.mxu0 0.0
    %370 = vmatprep.subr.mxu0 0.0
    %371 = vmatpush1.msra.mxu0 0.0
    %372 = vmatprep.subr.mxu0 0.0
    %373 = vmatpush1.msra.mxu0 0.0
    %374 = vmatprep.subr.mxu0 0.0
    %375 = vmatpush1.msra.mxu0 0.0
    %376 = vmatprep.subr.mxu0 0.0
    %377 = vmatpush1.msra.mxu0 0.0
    %378 = vmatprep.subr.mxu0 0.0
    %379 = vmatpush1.msra.mxu0 0.0
    %380 = vmatprep.subr.mxu0 0.0
    %381 = vmatpush1.msra.mxu0 0.0
    %382 = vmatprep.subr.mxu0 0.0
    %383 = vmatpush1.msra.mxu0 0.0
    %384 = vmatprep.subr.mxu0 0.0
    %385 = vmatpush1.msra.mxu0 0.0
    %386 = vmatprep.subr.mxu0 0.0
    %387 = vmatpush1.msra.mxu0 0.0
    %388 = vmatprep.subr.mxu0 0.0
    %389 = vmatpush1.msra.mxu0 0.0
    %390 = vmatprep.subr.mxu0 0.0
    %391 = vmatpush1.msra.mxu0 0.0
    %392 = vmatprep.subr.mxu0 0.0
    %393 = vmatpush1.msra.mxu0 0.0
    %394 = vmatprep.subr.mxu0 0.0
    %395 = vmatpush1.msra.mxu0 0.0
    %396 = vmatprep.mubr.f32.mxu0 0.0
    %397 = vmatmul.mubr.f32.gmra.mrb[0].mxu0 %v314
    %v398 = vpop.f32.mrb[0].mxu0
    %v399 = vadd.f32 0.0, %v398
    %v400 = vpop.f32.mrb[0].mxu0
    %401 = vdwg.mxu0
    %v402 = vld [vmem:[#allocation8 + $0x6] sm:$0x1]
    %v403 = vld [vmem:[#allocation8 + $0x7] sm:$0x1]
    %404 = vadd.xlane.f32.xlu0 %v399
    %v405 = vpop.xlane.xlu0 %404
    %v406 = vmul.f32 %v399, %v399
    %407 = vadd.xlane.f32.xlu0 %v406
    %v408 = vpop.xlane.xlu0 %407
    %v409 = vmul.f32 %v405, 0.0125
    %v410 = vmul.f32 %v408, 0.0125
    %v411 = vmul.f32 %v409, %v409
    %v412 = vsub.f32 %v410, %v411
    %v413 = vadd.f32 %v412, 1e-05
    %v414 = vrsqrt.pop %v413
    %v415 = vlaneseq
    %v416 = vshrl.u32 %v415, 7
    %v417 = vsub.s32 0, %v416
    %v418 = vrot.slane %v402, %v417
    %v419 = vmul.f32 %v418, %v414
    %v420 = vmul.f32 %v399, %v419
    %v421 = vmul.f32 %v409, %v419
    %v422 = vlaneseq
    %v423 = vshrl.u32 %v422, 7
    %v424 = vsub.s32 0, %v423
    %v425 = vrot.slane %v403, %v424
    %v426 = vsub.f32 %v425, %v421
    %v427 = vadd.f32 %v420, %v426
    %v428 = vadd.f32 %v427, %v190
    %v429 = vxor.u32 %v428, 2147483648
    %v430 = vmul.f32 %v429, 1.442695
    %v431 = vpow.pop %v430
    %v432 = vadd.f32 %v431, 1.0
    %v433 = vrcp.pop %v432
    %v434 = vmul.f32 1.0, %v433
    %v435 = vmul.f32 %v428, %v434
    %s436 = scalar_lea.vmem [#allocation7], 256
    %v437 = vld [vmem:[%s436] sm:$0xff]
    %v438 = vld [vmem:[%s436 + $0x8] sm:$0xff]
    %v439 = vld [vmem:[%s436 + $0x10] sm:$0xff]
    %v440 = vld [vmem:[%s436 + $0x18] sm:$0xff]
    %v441 = vld [vmem:[%s436 + $0x20] sm:$0xff]
    %v442 = vld [vmem:[%s436 + $0x28] sm:$0xff]
    %v443 = vld [vmem:[%s436 + $0x30] sm:$0xff]
    %v444 = vld [vmem:[%s436 + $0x38] sm:$0xff]
    %v445 = vld [vmem:[%s436 + $0x40] sm:$0xff]
    %v446 = vld [vmem:[%s436 + $0x48] sm:$0xff]
    %v447 = vld [vmem:[%s436 + $0x50] sm:$0xff]
    %v448 = vld [vmem:[%s436 + $0x58] sm:$0xff]
    %v449 = vld [vmem:[%s436 + $0x60] sm:$0xff]
    %v450 = vld [vmem:[%s436 + $0x68] sm:$0xff]
    %v451 = vld [vmem:[%s436 + $0x70] sm:$0xff]
    %v452 = vld [vmem:[%s436 + $0x78] sm:$0xff]
    %v453 = vld [vmem:[#allocation8 + $0x8] sm:$0x1]
    %v454 = vlaneseq
    %v455 = vshrl.u32 %v454, 7
    %v456 = vsub.s32 0, %v455
    %v457 = vrot.slane %v453, %v456
    %458 = vmatprep.subr.mxu0 0.0
    %459 = vmatpush1.msra.mxu0 %v437
    %460 = vmatprep.subr.mxu0 0.0
    %461 = vmatpush1.msra.mxu0 %v438
    %462 = vmatprep.subr.mxu0 0.0
    %463 = vmatpush1.msra.mxu0 %v439
    %464 = vmatprep.subr.mxu0 0.0
    %465 = vmatpush1.msra.mxu0 %v440
    %466 = vmatprep.subr.mxu0 0.0
    %467 = vmatpush1.msra.mxu0 %v441
    %468 = vmatprep.subr.mxu0 0.0
    %469 = vmatpush1.msra.mxu0 %v442
    %470 = vmatprep.subr.mxu0 0.0
    %471 = vmatpush1.msra.mxu0 %v443
    %472 = vmatprep.subr.mxu0 0.0
    %473 = vmatpush1.msra.mxu0 %v444
    %474 = vmatprep.subr.mxu0 0.0
    %475 = vmatpush1.msra.mxu0 %v445
    %476 = vmatprep.subr.mxu0 0.0
    %477 = vmatpush1.msra.mxu0 %v446
    %478 = vmatprep.subr.mxu0 0.0
    %479 = vmatpush1.msra.mxu0 %v447
    %480 = vmatprep.subr.mxu0 0.0
    %481 = vmatpush1.msra.mxu0 %v448
    %482 = vmatprep.subr.mxu0 0.0
    %483 = vmatpush1.msra.mxu0 %v449
    %484 = vmatprep.subr.mxu0 0.0
    %485 = vmatpush1.msra.mxu0 %v450
    %486 = vmatprep.subr.mxu0 0.0
    %487 = vmatpush1.msra.mxu0 %v451
    %488 = vmatprep.subr.mxu0 0.0
    %489 = vmatpush1.msra.mxu0 %v452
    %490 = vmatprep.subr.mxu0 0.0
    %491 = vmatpush1.msra.mxu0 0.0
    %492 = vmatprep.subr.mxu0 0.0
    %493 = vmatpush1.msra.mxu0 0.0
    %494 = vmatprep.subr.mxu0 0.0
    %495 = vmatpush1.msra.mxu0 0.0
    %496 = vmatprep.subr.mxu0 0.0
    %497 = vmatpush1.msra.mxu0 0.0
    %498 = vmatprep.subr.mxu0 0.0
    %499 = vmatpush1.msra.mxu0 0.0
    %500 = vmatprep.subr.mxu0 0.0
    %501 = vmatpush1.msra.mxu0 0.0
    %502 = vmatprep.subr.mxu0 0.0
    %503 = vmatpush1.msra.mxu0 0.0
    %504 = vmatprep.subr.mxu0 0.0
    %505 = vmatpush1.msra.mxu0 0.0
    %506 = vmatprep.subr.mxu0 0.0
    %507 = vmatpush1.msra.mxu0 0.0
    %508 = vmatprep.subr.mxu0 0.0
    %509 = vmatpush1.msra.mxu0 0.0
    %510 = vmatprep.subr.mxu0 0.0
    %511 = vmatpush1.msra.mxu0 0.0
    %512 = vmatprep.subr.mxu0 0.0
    %513 = vmatpush1.msra.mxu0 0.0
    %514 = vmatprep.subr.mxu0 0.0
    %515 = vmatpush1.msra.mxu0 0.0
    %516 = vmatprep.subr.mxu0 0.0
    %517 = vmatpush1.msra.mxu0 0.0
    %518 = vmatprep.subr.mxu0 0.0
    %519 = vmatpush1.msra.mxu0 0.0
    %520 = vmatprep.subr.mxu0 0.0
    %521 = vmatpush1.msra.mxu0 0.0
    %522 = vmatprep.mubr.f32.mxu0 0.0
    %523 = vmatmul.mubr.f32.gmra.mrb[0].mxu0 %v435
    %v524 = vpop.f32.mrb[0].mxu0
    %v525 = vadd.f32 %v457, %v524
    %v526 = vpop.f32.mrb[0].mxu0
    %527 = vdwg.mxu0
    %v528 = vld [vmem:[#allocation8 + $0x9] sm:$0x1]
    %v529 = vld [vmem:[#allocation8 + $0xa] sm:$0x1]
    %530 = vadd.xlane.f32.xlu0 %v525
    %v531 = vpop.xlane.xlu0 %530
    %v532 = vmul.f32 %v525, %v525
    %533 = vadd.xlane.f32.xlu0 %v532
    %v534 = vpop.xlane.xlu0 %533
    %v535 = vmul.f32 %v531, 0.0125
    %v536 = vmul.f32 %v534, 0.0125
    %v537 = vmul.f32 %v535, %v535
    %v538 = vsub.f32 %v536, %v537
    %v539 = vadd.f32 %v538, 1e-05
    %v540 = vrsqrt.pop %v539
    %v541 = vlaneseq
    %v542 = vshrl.u32 %v541, 7
    %v543 = vsub.s32 0, %v542
    %v544 = vrot.slane %v528, %v543
    %v545 = vmul.f32 %v544, %v540
    %v546 = vmul.f32 %v525, %v545
    %v547 = vmul.f32 %v535, %v545
    %v548 = vlaneseq
    %v549 = vshrl.u32 %v548, 7
    %v550 = vsub.s32 0, %v549
    %v551 = vrot.slane %v529, %v550
    %v552 = vsub.f32 %v551, %v547
    %v553 = vadd.f32 %v546, %v552
    %v554 = vxor.u32 %v553, 2147483648
    %v555 = vmul.f32 %v554, 1.442695
    %v556 = vpow.pop %v555
    %v557 = vadd.f32 %v556, 1.0
    %v558 = vrcp.pop %v557
    %v559 = vmul.f32 1.0, %v558
    %v560 = vmul.f32 %v553, %v559
    %s561 = scalar_lea.vmem [#allocation7], 384
    %v562 = vld [vmem:[%s561] sm:$0xff]
    %v563 = vld [vmem:[%s561 + $0x8] sm:$0xff]
    %v564 = vld [vmem:[%s561 + $0x10] sm:$0xff]
    %v565 = vld [vmem:[%s561 + $0x18] sm:$0xff]
    %v566 = vld [vmem:[%s561 + $0x20] sm:$0xff]
    %v567 = vld [vmem:[%s561 + $0x28] sm:$0xff]
    %v568 = vld [vmem:[%s561 + $0x30] sm:$0xff]
    %v569 = vld [vmem:[%s561 + $0x38] sm:$0xff]
    %v570 = vld [vmem:[%s561 + $0x40] sm:$0xff]
    %v571 = vld [vmem:[%s561 + $0x48] sm:$0xff]
    %v572 = vld [vmem:[%s561 + $0x50] sm:$0xff]
    %v573 = vld [vmem:[%s561 + $0x58] sm:$0xff]
    %v574 = vld [vmem:[%s561 + $0x60] sm:$0xff]
    %v575 = vld [vmem:[%s561 + $0x68] sm:$0xff]
    %v576 = vld [vmem:[%s561 + $0x70] sm:$0xff]
    %v577 = vld [vmem:[%s561 + $0x78] sm:$0xff]
    %578 = vmatprep.subr.mxu0 0.0
    %579 = vmatpush1.msra.mxu0 %v562
    %580 = vmatprep.subr.mxu0 0.0
    %581 = vmatpush1.msra.mxu0 %v563
    %582 = vmatprep.subr.mxu0 0.0
    %583 = vmatpush1.msra.mxu0 %v564
    %584 = vmatprep.subr.mxu0 0.0
    %585 = vmatpush1.msra.mxu0 %v565
    %586 = vmatprep.subr.mxu0 0.0
    %587 = vmatpush1.msra.mxu0 %v566
    %588 = vmatprep.subr.mxu0 0.0
    %589 = vmatpush1.msra.mxu0 %v567
    %590 = vmatprep.subr.mxu0 0.0
    %591 = vmatpush1.msra.mxu0 %v568
    %592 = vmatprep.subr.mxu0 0.0
    %593 = vmatpush1.msra.mxu0 %v569
    %594 = vmatprep.subr.mxu0 0.0
    %595 = vmatpush1.msra.mxu0 %v570
    %596 = vmatprep.subr.mxu0 0.0
    %597 = vmatpush1.msra.mxu0 %v571
    %598 = vmatprep.subr.mxu0 0.0
    %599 = vmatpush1.msra.mxu0 %v572
    %600 = vmatprep.subr.mxu0 0.0
    %601 = vmatpush1.msra.mxu0 %v573
    %602 = vmatprep.subr.mxu0 0.0
    %603 = vmatpush1.msra.mxu0 %v574
    %604 = vmatprep.subr.mxu0 0.0
    %605 = vmatpush1.msra.mxu0 %v575
    %606 = vmatprep.subr.mxu0 0.0
    %607 = vmatpush1.msra.mxu0 %v576
    %608 = vmatprep.subr.mxu0 0.0
    %609 = vmatpush1.msra.mxu0 %v577
    %610 = vmatprep.subr.mxu0 0.0
    %611 = vmatpush1.msra.mxu0 0.0
    %612 = vmatprep.subr.mxu0 0.0
    %613 = vmatpush1.msra.mxu0 0.0
    %614 = vmatprep.subr.mxu0 0.0
    %615 = vmatpush1.msra.mxu0 0.0
    %616 = vmatprep.subr.mxu0 0.0
    %617 = vmatpush1.msra.mxu0 0.0
    %618 = vmatprep.subr.mxu0 0.0
    %619 = vmatpush1.msra.mxu0 0.0
    %620 = vmatprep.subr.mxu0 0.0
    %621 = vmatpush1.msra.mxu0 0.0
    %622 = vmatprep.subr.mxu0 0.0
    %623 = vmatpush1.msra.mxu0 0.0
    %624 = vmatprep.subr.mxu0 0.0
    %625 = vmatpush1.msra.mxu0 0.0
    %626 = vmatprep.subr.mxu0 0.0
    %627 = vmatpush1.msra.mxu0 0.0
    %628 = vmatprep.subr.mxu0 0.0
    %629 = vmatpush1.msra.mxu0 0.0
    %630 = vmatprep.subr.mxu0 0.0
    %631 = vmatpush1.msra.mxu0 0.0
    %632 = vmatprep.subr.mxu0 0.0
    %633 = vmatpush1.msra.mxu0 0.0
    %634 = vmatprep.subr.mxu0 0.0
    %635 = vmatpush1.msra.mxu0 0.0
    %636 = vmatprep.subr.mxu0 0.0
    %637 = vmatpush1.msra.mxu0 0.0
    %638 = vmatprep.subr.mxu0 0.0
    %639 = vmatpush1.msra.mxu0 0.0
    %640 = vmatprep.subr.mxu0 0.0
    %641 = vmatpush1.msra.mxu0 0.0
    %642 = vmatprep.mubr.f32.mxu0 0.0
    %643 = vmatmul.mubr.f32.gmra.mrb[0].mxu0 %v560
    %v644 = vpop.f32.mrb[0].mxu0
    %v645 = vadd.f32 0.0, %v644
    %v646 = vpop.f32.mrb[0].mxu0
    %647 = vdwg.mxu0
    %v648 = vld [vmem:[#allocation8 + $0xb] sm:$0x1]
    %v649 = vld [vmem:[#allocation8 + $0xc] sm:$0x1]
    %650 = vadd.xlane.f32.xlu0 %v645
    %v651 = vpop.xlane.xlu0 %650
    %v652 = vmul.f32 %v645, %v645
    %653 = vadd.xlane.f32.xlu0 %v652
    %v654 = vpop.xlane.xlu0 %653
    %v655 = vmul.f32 %v651, 0.0125
    %v656 = vmul.f32 %v654, 0.0125
    %v657 = vmul.f32 %v655, %v655
    %v658 = vsub.f32 %v656, %v657
    %v659 = vadd.f32 %v658, 1e-05
    %v660 = vrsqrt.pop %v659
    %v661 = vlaneseq
    %v662 = vshrl.u32 %v661, 7
    %v663 = vsub.s32 0, %v662
    %v664 = vrot.slane %v648, %v663
    %v665 = vmul.f32 %v664, %v660
    %v666 = vmul.f32 %v645, %v665
    %v667 = vmul.f32 %v655, %v665
    %v668 = vlaneseq
    %v669 = vshrl.u32 %v668, 7
    %v670 = vsub.s32 0, %v669
    %v671 = vrot.slane %v649, %v670
    %v672 = vsub.f32 %v671, %v667
    %v673 = vadd.f32 %v666, %v672
    %v674 = vadd.f32 %v673, %v435
    %v675 = vxor.u32 %v674, 2147483648
    %v676 = vmul.f32 %v675, 1.442695
    %v677 = vpow.pop %v676
    %v678 = vadd.f32 %v677, 1.0
    %v679 = vrcp.pop %v678
    %v680 = vmul.f32 1.0, %v679
    %v681 = vmul.f32 %v674, %v680
    %s682 = scalar_lea.vmem [#allocation7], 512
    %v683 = vld [vmem:[%s682] sm:$0xff]
    %v684 = vld [vmem:[%s682 + $0x8] sm:$0xff]
    %v685 = vld [vmem:[%s682 + $0x10] sm:$0xff]
    %v686 = vld [vmem:[%s682 + $0x18] sm:$0xff]
    %v687 = vld [vmem:[%s682 + $0x20] sm:$0xff]
    %v688 = vld [vmem:[%s682 + $0x28] sm:$0xff]
    %v689 = vld [vmem:[%s682 + $0x30] sm:$0xff]
    %v690 = vld [vmem:[%s682 + $0x38] sm:$0xff]
    %v691 = vld [vmem:[%s682 + $0x40] sm:$0xff]
    %v692 = vld [vmem:[%s682 + $0x48] sm:$0xff]
    %v693 = vld [vmem:[%s682 + $0x50] sm:$0xff]
    %v694 = vld [vmem:[%s682 + $0x58] sm:$0xff]
    %v695 = vld [vmem:[%s682 + $0x60] sm:$0xff]
    %v696 = vld [vmem:[%s682 + $0x68] sm:$0xff]
    %v697 = vld [vmem:[%s682 + $0x70] sm:$0xff]
    %v698 = vld [vmem:[%s682 + $0x78] sm:$0xff]
    %v699 = vld [vmem:[#allocation8 + $0xd] sm:$0x1]
    %v700 = vlaneseq
    %v701 = vshrl.u32 %v700, 7
    %v702 = vsub.s32 0, %v701
    %v703 = vrot.slane %v699, %v702
    %704 = vmatprep.subr.mxu0 0.0
    %705 = vmatpush1.msra.mxu0 %v683
    %706 = vmatprep.subr.mxu0 0.0
    %707 = vmatpush1.msra.mxu0 %v684
    %708 = vmatprep.subr.mxu0 0.0
    %709 = vmatpush1.msra.mxu0 %v685
    %710 = vmatprep.subr.mxu0 0.0
    %711 = vmatpush1.msra.mxu0 %v686
    %712 = vmatprep.subr.mxu0 0.0
    %713 = vmatpush1.msra.mxu0 %v687
    %714 = vmatprep.subr.mxu0 0.0
    %715 = vmatpush1.msra.mxu0 %v688
    %716 = vmatprep.subr.mxu0 0.0
    %717 = vmatpush1.msra.mxu0 %v689
    %718 = vmatprep.subr.mxu0 0.0
    %719 = vmatpush1.msra.mxu0 %v690
    %720 = vmatprep.subr.mxu0 0.0
    %721 = vmatpush1.msra.mxu0 %v691
    %722 = vmatprep.subr.mxu0 0.0
    %723 = vmatpush1.msra.mxu0 %v692
    %724 = vmatprep.subr.mxu0 0.0
    %725 = vmatpush1.msra.mxu0 %v693
    %726 = vmatprep.subr.mxu0 0.0
    %727 = vmatpush1.msra.mxu0 %v694
    %728 = vmatprep.subr.mxu0 0.0
    %729 = vmatpush1.msra.mxu0 %v695
    %730 = vmatprep.subr.mxu0 0.0
    %731 = vmatpush1.msra.mxu0 %v696
    %732 = vmatprep.subr.mxu0 0.0
    %733 = vmatpush1.msra.mxu0 %v697
    %734 = vmatprep.subr.mxu0 0.0
    %735 = vmatpush1.msra.mxu0 %v698
    %736 = vmatprep.subr.mxu0 0.0
    %737 = vmatpush1.msra.mxu0 0.0
    %738 = vmatprep.subr.mxu0 0.0
    %739 = vmatpush1.msra.mxu0 0.0
    %740 = vmatprep.subr.mxu0 0.0
    %741 = vmatpush1.msra.mxu0 0.0
    %742 = vmatprep.subr.mxu0 0.0
    %743 = vmatpush1.msra.mxu0 0.0
    %744 = vmatprep.subr.mxu0 0.0
    %745 = vmatpush1.msra.mxu0 0.0
    %746 = vmatprep.subr.mxu0 0.0
    %747 = vmatpush1.msra.mxu0 0.0
    %748 = vmatprep.subr.mxu0 0.0
    %749 = vmatpush1.msra.mxu0 0.0
    %750 = vmatprep.subr.mxu0 0.0
    %751 = vmatpush1.msra.mxu0 0.0
    %752 = vmatprep.subr.mxu0 0.0
    %753 = vmatpush1.msra.mxu0 0.0
    %754 = vmatprep.subr.mxu0 0.0
    %755 = vmatpush1.msra.mxu0 0.0
    %756 = vmatprep.subr.mxu0 0.0
    %757 = vmatpush1.msra.mxu0 0.0
    %758 = vmatprep.subr.mxu0 0.0
    %759 = vmatpush1.msra.mxu0 0.0
    %760 = vmatprep.subr.mxu0 0.0
    %761 = vmatpush1.msra.mxu0 0.0
    %762 = vmatprep.subr.mxu0 0.0
    %763 = vmatpush1.msra.mxu0 0.0
    %764 = vmatprep.subr.mxu0 0.0
    %765 = vmatpush1.msra.mxu0 0.0
    %766 = vmatprep.subr.mxu0 0.0
    %767 = vmatpush1.msra.mxu0 0.0
    %768 = vmatprep.mubr.f32.mxu0 0.0
    %769 = vmatmul.mubr.f32.gmra.mrb[0].mxu0 %v681
    %v770 = vpop.f32.mrb[0].mxu0
    %v771 = vadd.f32 %v703, %v770
    %v772 = vpop.f32.mrb[0].mxu0
    %773 = vdwg.mxu0
    %v774 = vld [vmem:[#allocation8 + $0xe] sm:$0x1]
    %v775 = vld [vmem:[#allocation8 + $0xf] sm:$0x1]
    %776 = vadd.xlane.f32.xlu0 %v771
    %v777 = vpop.xlane.xlu0 %776
    %v778 = vmul.f32 %v771, %v771
    %779 = vadd.xlane.f32.xlu0 %v778
    %v780 = vpop.xlane.xlu0 %779
    %v781 = vmul.f32 %v777, 0.0125
    %v782 = vmul.f32 %v780, 0.0125
    %v783 = vmul.f32 %v781, %v781
    %v784 = vsub.f32 %v782, %v783
    %v785 = vadd.f32 %v784, 1e-05
    %v786 = vrsqrt.pop %v785
    %v787 = vlaneseq
    %v788 = vshrl.u32 %v787, 7
    %v789 = vsub.s32 0, %v788
    %v790 = vrot.slane %v774, %v789
    %v791 = vmul.f32 %v790, %v786
    %v792 = vmul.f32 %v771, %v791
    %v793 = vmul.f32 %v781, %v791
    %v794 = vlaneseq
    %v795 = vshrl.u32 %v794, 7
    %v796 = vsub.s32 0, %v795
    %v797 = vrot.slane %v775, %v796
    %v798 = vsub.f32 %v797, %v793
    %v799 = vadd.f32 %v792, %v798
    %v800 = vxor.u32 %v799, 2147483648
    %v801 = vmul.f32 %v800, 1.442695
    %v802 = vpow.pop %v801
    %v803 = vadd.f32 %v802, 1.0
    %v804 = vrcp.pop %v803
    %v805 = vmul.f32 1.0, %v804
    %v806 = vmul.f32 %v799, %v805
    %s807 = scalar_lea.vmem [#allocation7], 640
    %v808 = vld [vmem:[%s807] sm:$0xff]
    %v809 = vld [vmem:[%s807 + $0x8] sm:$0xff]
    %v810 = vld [vmem:[%s807 + $0x10] sm:$0xff]
    %v811 = vld [vmem:[%s807 + $0x18] sm:$0xff]
    %v812 = vld [vmem:[%s807 + $0x20] sm:$0xff]
    %v813 = vld [vmem:[%s807 + $0x28] sm:$0xff]
    %v814 = vld [vmem:[%s807 + $0x30] sm:$0xff]
    %v815 = vld [vmem:[%s807 + $0x38] sm:$0xff]
    %v816 = vld [vmem:[%s807 + $0x40] sm:$0xff]
    %v817 = vld [vmem:[%s807 + $0x48] sm:$0xff]
    %v818 = vld [vmem:[%s807 + $0x50] sm:$0xff]
    %v819 = vld [vmem:[%s807 + $0x58] sm:$0xff]
    %v820 = vld [vmem:[%s807 + $0x60] sm:$0xff]
    %v821 = vld [vmem:[%s807 + $0x68] sm:$0xff]
    %v822 = vld [vmem:[%s807 + $0x70] sm:$0xff]
    %v823 = vld [vmem:[%s807 + $0x78] sm:$0xff]
    %824 = vmatprep.subr.mxu0 0.0
    %825 = vmatpush1.msra.mxu0 %v808
    %826 = vmatprep.subr.mxu0 0.0
    %827 = vmatpush1.msra.mxu0 %v809
    %828 = vmatprep.subr.mxu0 0.0
    %829 = vmatpush1.msra.mxu0 %v810
    %830 = vmatprep.subr.mxu0 0.0
    %831 = vmatpush1.msra.mxu0 %v811
    %832 = vmatprep.subr.mxu0 0.0
    %833 = vmatpush1.msra.mxu0 %v812
    %834 = vmatprep.subr.mxu0 0.0
    %835 = vmatpush1.msra.mxu0 %v813
    %836 = vmatprep.subr.mxu0 0.0
    %837 = vmatpush1.msra.mxu0 %v814
    %838 = vmatprep.subr.mxu0 0.0
    %839 = vmatpush1.msra.mxu0 %v815
    %840 = vmatprep.subr.mxu0 0.0
    %841 = vmatpush1.msra.mxu0 %v816
    %842 = vmatprep.subr.mxu0 0.0
    %843 = vmatpush1.msra.mxu0 %v817
    %844 = vmatprep.subr.mxu0 0.0
    %845 = vmatpush1.msra.mxu0 %v818
    %846 = vmatprep.subr.mxu0 0.0
    %847 = vmatpush1.msra.mxu0 %v819
    %848 = vmatprep.subr.mxu0 0.0
    %849 = vmatpush1.msra.mxu0 %v820
    %850 = vmatprep.subr.mxu0 0.0
    %851 = vmatpush1.msra.mxu0 %v821
    %852 = vmatprep.subr.mxu0 0.0
    %853 = vmatpush1.msra.mxu0 %v822
    %854 = vmatprep.subr.mxu0 0.0
    %855 = vmatpush1.msra.mxu0 %v823
    %856 = vmatprep.subr.mxu0 0.0
    %857 = vmatpush1.msra.mxu0 0.0
    %858 = vmatprep.subr.mxu0 0.0
    %859 = vmatpush1.msra.mxu0 0.0
    %860 = vmatprep.subr.mxu0 0.0
    %861 = vmatpush1.msra.mxu0 0.0
    %862 = vmatprep.subr.mxu0 0.0
    %863 = vmatpush1.msra.mxu0 0.0
    %864 = vmatprep.subr.mxu0 0.0
    %865 = vmatpush1.msra.mxu0 0.0
    %866 = vmatprep.subr.mxu0 0.0
    %867 = vmatpush1.msra.mxu0 0.0
    %868 = vmatprep.subr.mxu0 0.0
    %869 = vmatpush1.msra.mxu0 0.0
    %870 = vmatprep.subr.mxu0 0.0
    %871 = vmatpush1.msra.mxu0 0.0
    %872 = vmatprep.subr.mxu0 0.0
    %873 = vmatpush1.msra.mxu0 0.0
    %874 = vmatprep.subr.mxu0 0.0
    %875 = vmatpush1.msra.mxu0 0.0
    %876 = vmatprep.subr.mxu0 0.0
    %877 = vmatpush1.msra.mxu0 0.0
    %878 = vmatprep.subr.mxu0 0.0
    %879 = vmatpush1.msra.mxu0 0.0
    %880 = vmatprep.subr.mxu0 0.0
    %881 = vmatpush1.msra.mxu0 0.0
    %882 = vmatprep.subr.mxu0 0.0
    %883 = vmatpush1.msra.mxu0 0.0
    %884 = vmatprep.subr.mxu0 0.0
    %885 = vmatpush1.msra.mxu0 0.0
    %886 = vmatprep.subr.mxu0 0.0
    %887 = vmatpush1.msra.mxu0 0.0
    %888 = vmatprep.mubr.f32.mxu0 0.0
    %889 = vmatmul.mubr.f32.gmra.mrb[0].mxu0 %v806
    %v890 = vpop.f32.mrb[0].mxu0
    %v891 = vadd.f32 0.0, %v890
    %v892 = vpop.f32.mrb[0].mxu0
    %893 = vdwg.mxu0
    %v894 = vld [vmem:[#allocation8 + $0x10] sm:$0x1]
    %v895 = vld [vmem:[#allocation8 + $0x11] sm:$0x1]
    %896 = vadd.xlane.f32.xlu0 %v891
    %v897 = vpop.xlane.xlu0 %896
    %v898 = vmul.f32 %v891, %v891
    %899 = vadd.xlane.f32.xlu0 %v898
    %v900 = vpop.xlane.xlu0 %899
    %v901 = vmul.f32 %v897, 0.0125
    %v902 = vmul.f32 %v900, 0.0125
    %v903 = vmul.f32 %v901, %v901
    %v904 = vsub.f32 %v902, %v903
    %v905 = vadd.f32 %v904, 1e-05
    %v906 = vrsqrt.pop %v905
    %v907 = vlaneseq
    %v908 = vshrl.u32 %v907, 7
    %v909 = vsub.s32 0, %v908
    %v910 = vrot.slane %v894, %v909
    %v911 = vmul.f32 %v910, %v906
    %v912 = vmul.f32 %v891, %v911
    %v913 = vmul.f32 %v901, %v911
    %v914 = vlaneseq
    %v915 = vshrl.u32 %v914, 7
    %v916 = vsub.s32 0, %v915
    %v917 = vrot.slane %v895, %v916
    %v918 = vsub.f32 %v917, %v913
    %v919 = vadd.f32 %v912, %v918
    %v920 = vadd.f32 %v919, %v681
    %v921 = vxor.u32 %v920, 2147483648
    %v922 = vmul.f32 %v921, 1.442695
    %v923 = vpow.pop %v922
    %v924 = vadd.f32 %v923, 1.0
    %v925 = vrcp.pop %v924
    %v926 = vmul.f32 1.0, %v925
    %v927 = vmul.f32 %v920, %v926
    %s928 = scalar_lea.vmem [#allocation7], 768
    %v929 = vld [vmem:[%s928] sm:$0xff]
    %v930 = vld [vmem:[%s928 + $0x8] sm:$0xff]
    %v931 = vld [vmem:[%s928 + $0x10] sm:$0xff]
    %v932 = vld [vmem:[%s928 + $0x18] sm:$0xff]
    %v933 = vld [vmem:[%s928 + $0x20] sm:$0xff]
    %v934 = vld [vmem:[%s928 + $0x28] sm:$0xff]
    %v935 = vld [vmem:[%s928 + $0x30] sm:$0xff]
    %v936 = vld [vmem:[%s928 + $0x38] sm:$0xff]
    %v937 = vld [vmem:[%s928 + $0x40] sm:$0xff]
    %v938 = vld [vmem:[%s928 + $0x48] sm:$0xff]
    %v939 = vld [vmem:[%s928 + $0x50] sm:$0xff]
    %v940 = vld [vmem:[%s928 + $0x58] sm:$0xff]
    %v941 = vld [vmem:[%s928 + $0x60] sm:$0xff]
    %v942 = vld [vmem:[%s928 + $0x68] sm:$0xff]
    %v943 = vld [vmem:[%s928 + $0x70] sm:$0xff]
    %v944 = vld [vmem:[%s928 + $0x78] sm:$0xff]
    %v945 = vld [vmem:[#allocation8 + $0x12] sm:$0x1]
    %v946 = vlaneseq
    %v947 = vshrl.u32 %v946, 7
    %v948 = vsub.s32 0, %v947
    %v949 = vrot.slane %v945, %v948
    %950 = vmatprep.subr.mxu0 0.0
    %951 = vmatpush1.msra.mxu0 %v929
    %952 = vmatprep.subr.mxu0 0.0
    %953 = vmatpush1.msra.mxu0 %v930
    %954 = vmatprep.subr.mxu0 0.0
    %955 = vmatpush1.msra.mxu0 %v931
    %956 = vmatprep.subr.mxu0 0.0
    %957 = vmatpush1.msra.mxu0 %v932
    %958 = vmatprep.subr.mxu0 0.0
    %959 = vmatpush1.msra.mxu0 %v933
    %960 = vmatprep.subr.mxu0 0.0
    %961 = vmatpush1.msra.mxu0 %v934
    %962 = vmatprep.subr.mxu0 0.0
    %963 = vmatpush1.msra.mxu0 %v935
    %964 = vmatprep.subr.mxu0 0.0
    %965 = vmatpush1.msra.mxu0 %v936
    %966 = vmatprep.subr.mxu0 0.0
    %967 = vmatpush1.msra.mxu0 %v937
    %968 = vmatprep.subr.mxu0 0.0
    %969 = vmatpush1.msra.mxu0 %v938
    %970 = vmatprep.subr.mxu0 0.0
    %971 = vmatpush1.msra.mxu0 %v939
    %972 = vmatprep.subr.mxu0 0.0
    %973 = vmatpush1.msra.mxu0 %v940
    %974 = vmatprep.subr.mxu0 0.0
    %975 = vmatpush1.msra.mxu0 %v941
    %976 = vmatprep.subr.mxu0 0.0
    %977 = vmatpush1.msra.mxu0 %v942
    %978 = vmatprep.subr.mxu0 0.0
    %979 = vmatpush1.msra.mxu0 %v943
    %980 = vmatprep.subr.mxu0 0.0
    %981 = vmatpush1.msra.mxu0 %v944
    %982 = vmatprep.subr.mxu0 0.0
    %983 = vmatpush1.msra.mxu0 0.0
    %984 = vmatprep.subr.mxu0 0.0
    %985 = vmatpush1.msra.mxu0 0.0
    %986 = vmatprep.subr.mxu0 0.0
    %987 = vmatpush1.msra.mxu0 0.0
    %988 = vmatprep.subr.mxu0 0.0
    %989 = vmatpush1.msra.mxu0 0.0
    %990 = vmatprep.subr.mxu0 0.0
    %991 = vmatpush1.msra.mxu0 0.0
    %992 = vmatprep.subr.mxu0 0.0
    %993 = vmatpush1.msra.mxu0 0.0
    %994 = vmatprep.subr.mxu0 0.0
    %995 = vmatpush1.msra.mxu0 0.0
    %996 = vmatprep.subr.mxu0 0.0
    %997 = vmatpush1.msra.mxu0 0.0
    %998 = vmatprep.subr.mxu0 0.0
    %999 = vmatpush1.msra.mxu0 0.0
    %1000 = vmatprep.subr.mxu0 0.0
    %1001 = vmatpush1.msra.mxu0 0.0
    %1002 = vmatprep.subr.mxu0 0.0
    %1003 = vmatpush1.msra.mxu0 0.0
    %1004 = vmatprep.subr.mxu0 0.0
    %1005 = vmatpush1.msra.mxu0 0.0
    %1006 = vmatprep.subr.mxu0 0.0
    %1007 = vmatpush1.msra.mxu0 0.0
    %1008 = vmatprep.subr.mxu0 0.0
    %1009 = vmatpush1.msra.mxu0 0.0
    %1010 = vmatprep.subr.mxu0 0.0
    %1011 = vmatpush1.msra.mxu0 0.0
    %1012 = vmatprep.subr.mxu0 0.0
    %1013 = vmatpush1.msra.mxu0 0.0
    %1014 = vmatprep.mubr.f32.mxu0 0.0
    %1015 = vmatmul.mubr.f32.gmra.mrb[0].mxu0 %v927
    %v1016 = vpop.f32.mrb[0].mxu0
    %v1017 = vadd.f32 %v949, %v1016
    %v1018 = vpop.f32.mrb[0].mxu0
    %1019 = vdwg.mxu0
    %v1020 = vxor.u32 %v1017, 2147483648
    %v1021 = vmul.f32 %v1020, 1.442695
    %v1022 = vpow.pop %v1021
    %v1023 = vadd.f32 %v1022, 1.0
    %v1024 = vrcp.pop %v1023
    %v1025 = vmul.f32 1.0, %v1024
    %v1026 = vmul.f32 %v1017, %v1025
    %s1027 = scalar_lea.vmem [#allocation7], 896
    %v1028 = vld [vmem:[%s1027] sm:$0xff]
    %v1029 = vld [vmem:[%s1027 + $0x8] sm:$0xff]
    %v1030 = vld [vmem:[%s1027 + $0x10] sm:$0xff]
    %v1031 = vld [vmem:[%s1027 + $0x18] sm:$0xff]
    %v1032 = vld [vmem:[%s1027 + $0x20] sm:$0xff]
    %v1033 = vld [vmem:[%s1027 + $0x28] sm:$0xff]
    %v1034 = vld [vmem:[%s1027 + $0x30] sm:$0xff]
    %v1035 = vld [vmem:[%s1027 + $0x38] sm:$0xff]
    %v1036 = vld [vmem:[%s1027 + $0x40] sm:$0xff]
    %v1037 = vld [vmem:[%s1027 + $0x48] sm:$0xff]
    %v1038 = vld [vmem:[%s1027 + $0x50] sm:$0xff]
    %v1039 = vld [vmem:[%s1027 + $0x58] sm:$0xff]
    %v1040 = vld [vmem:[%s1027 + $0x60] sm:$0xff]
    %v1041 = vld [vmem:[%s1027 + $0x68] sm:$0xff]
    %v1042 = vld [vmem:[%s1027 + $0x70] sm:$0xff]
    %v1043 = vld [vmem:[%s1027 + $0x78] sm:$0xff]
    %v1044 = vld [vmem:[#allocation8 + $0x13] sm:$0x1]
    %v1045 = vlaneseq
    %v1046 = vshrl.u32 %v1045, 7
    %v1047 = vsub.s32 0, %v1046
    %v1048 = vrot.slane %v1044, %v1047
    %1049 = vmatprep.subr.mxu0 0.0
    %1050 = vmatpush1.msra.mxu0 %v1028
    %1051 = vmatprep.subr.mxu0 0.0
    %1052 = vmatpush1.msra.mxu0 %v1029
    %1053 = vmatprep.subr.mxu0 0.0
    %1054 = vmatpush1.msra.mxu0 %v1030
    %1055 = vmatprep.subr.mxu0 0.0
    %1056 = vmatpush1.msra.mxu0 %v1031
    %1057 = vmatprep.subr.mxu0 0.0
    %1058 = vmatpush1.msra.mxu0 %v1032
    %1059 = vmatprep.subr.mxu0 0.0
    %1060 = vmatpush1.msra.mxu0 %v1033
    %1061 = vmatprep.subr.mxu0 0.0
    %1062 = vmatpush1.msra.mxu0 %v1034
    %1063 = vmatprep.subr.mxu0 0.0
    %1064 = vmatpush1.msra.mxu0 %v1035
    %1065 = vmatprep.subr.mxu0 0.0
    %1066 = vmatpush1.msra.mxu0 %v1036
    %1067 = vmatprep.subr.mxu0 0.0
    %1068 = vmatpush1.msra.mxu0 %v1037
    %1069 = vmatprep.subr.mxu0 0.0
    %1070 = vmatpush1.msra.mxu0 %v1038
    %1071 = vmatprep.subr.mxu0 0.0
    %1072 = vmatpush1.msra.mxu0 %v1039
    %1073 = vmatprep.subr.mxu0 0.0
    %1074 = vmatpush1.msra.mxu0 %v1040
    %1075 = vmatprep.subr.mxu0 0.0
    %1076 = vmatpush1.msra.mxu0 %v1041
    %1077 = vmatprep.subr.mxu0 0.0
    %1078 = vmatpush1.msra.mxu0 %v1042
    %1079 = vmatprep.subr.mxu0 0.0
    %1080 = vmatpush1.msra.mxu0 %v1043
    %1081 = vmatprep.subr.mxu0 0.0
    %1082 = vmatpush1.msra.mxu0 0.0
    %1083 = vmatprep.subr.mxu0 0.0
    %1084 = vmatpush1.msra.mxu0 0.0
    %1085 = vmatprep.subr.mxu0 0.0
    %1086 = vmatpush1.msra.mxu0 0.0
    %1087 = vmatprep.subr.mxu0 0.0
    %1088 = vmatpush1.msra.mxu0 0.0
    %1089 = vmatprep.subr.mxu0 0.0
    %1090 = vmatpush1.msra.mxu0 0.0
    %1091 = vmatprep.subr.mxu0 0.0
    %1092 = vmatpush1.msra.mxu0 0.0
    %1093 = vmatprep.subr.mxu0 0.0
    %1094 = vmatpush1.msra.mxu0 0.0
    %1095 = vmatprep.subr.mxu0 0.0
    %1096 = vmatpush1.msra.mxu0 0.0
    %1097 = vmatprep.subr.mxu0 0.0
    %1098 = vmatpush1.msra.mxu0 0.0
    %1099 = vmatprep.subr.mxu0 0.0
    %1100 = vmatpush1.msra.mxu0 0.0
    %1101 = vmatprep.subr.mxu0 0.0
    %1102 = vmatpush1.msra.mxu0 0.0
    %1103 = vmatprep.subr.mxu0 0.0
    %1104 = vmatpush1.msra.mxu0 0.0
    %1105 = vmatprep.subr.mxu0 0.0
    %1106 = vmatpush1.msra.mxu0 0.0
    %1107 = vmatprep.subr.mxu0 0.0
    %1108 = vmatpush1.msra.mxu0 0.0
    %1109 = vmatprep.subr.mxu0 0.0
    %1110 = vmatpush1.msra.mxu0 0.0
    %1111 = vmatprep.subr.mxu0 0.0
    %1112 = vmatpush1.msra.mxu0 0.0
    %1113 = vmatprep.mubr.f32.mxu0 0.0
    %1114 = vmatmul.mubr.f32.gmra.mrb[0].mxu0 %v1026
    %v1115 = vpop.f32.mrb[0].mxu0
    %v1116 = vadd.f32 %v1048, %v1115
    %v1117 = vpop.f32.mrb[0].mxu0
    %1118 = vdwg.mxu0
    %v1119 = vlaneseq
    %v1120 = vand.u32 %v1119, 127
    %vm1121 = vcmp.lt.s32.totalorder %v1120, 10
    %v1122 = vsel %vm1121, %v1116, -inf
    %1123 = vmax.xlane.f32.xlu0 %v1122
    %v1124 = vpop.xlane.xlu0 %1123
    %v1125 = vsub.f32 %v1122, %v1124
    %v1126 = vmul.f32 %v1125, 1.442695
    %v1127 = vpow.pop %v1126
    %1128 = vadd.xlane.f32.xlu0 %v1127
    %v1129 = vpop.xlane.xlu0 %1128
    %v1130 = vlog2.pop %v1129
    %v1131 = vmul.f32 %v1130, 0.6931472
    %v1132 = vadd.f32 %v1124, %v1131
    %v1133 = vsub.f32 %v1116, %v1132
    %vm1134 = vcmp.eq.s32.totalorder %v1120, 10
    %v1135 = vsel %vm1134, %v1116, 0.0
    %v1136 = vsel %vm1121, %v1133, %v1135
    %1137 = vst [vmem:[#allocation10] sm:$0xff] %v1136
    // Predicated region
    $region34: #{poker_nnet_forward.1} parent=1 // pred_check
      _
    $region35: #{poker_nnet_forward.1} parent=1 // pred_check_branch
      %1139 = sbr.rel (0) target = $region37
    $region36: #{poker_nnet_forward.1} parent=1 // pred_region
      %s1141 = ssub.s32 128, 128
      %1142 = vsyncadd [#allocation4], %s1141
      %s1144 = sshll.u32 [#allocation10], 4
      %s1145 = int_to_ptr.vmem [resolvable:$true] %s1144
      %1147 = dma.vmem_to_hbm [thread:$0]  %s1145, 128, %s4, [#allocation4]
    $region37: #{poker_nnet_forward.1} parent=1 // pred_fallthru
      _
    // Predicated region
    $region38: #{poker_nnet_forward.1} parent=1 // pred_check
      _
    $region39: #{poker_nnet_forward.1} parent=1 // pred_check_branch
      %1149 = sbr.rel (0) target = $region41
    $region40: #{poker_nnet_forward.1} parent=1 // pred_region
      %1150 = dma.done [#allocation4], 128
    $region41: #{poker_nnet_forward.1} parent=1 // pred_fallthru
      _
    %1151 = vsyncpa [#allocation3], 1
    %1152 = vsyncpa [#allocation6], 1
    %1153 = vsyncpa [#allocation9], 1
    %1154 = vsyncpa [#allocation4], 1

</llo_original>
